<compile_context>
chip_gen: v7x
topology: tpu7x:2x2x1
jax: 0.10.0
libtpu: 0.0.40
codegen_flags: <defaults>
</compile_context>

<pallas_src>
import functools

import jax
import jax.numpy as jnp
from jax import lax
from jax.experimental import pallas as pl
from jax.experimental.pallas import tpu as pltpu


def bilstm_kernel(x_ref,        # (T*B, I)
                  wih_ref,      # (I, 8H)   [fwd gates | rev gates], gate order i,f,g,o
                  whh_ref,      # (2H, 8H)  block-diag: [[Whh_f^T, 0], [0, Whh_r^T]]
                  b_ref,        # (1, 8H)   bih + bhh, both directions, pre-folded
                  fcw_ref,      # (1, 2H)
                  fcb_ref,      # (1, 1)
                  out_ref,      # (T, 1)
                  feat_scr,     # (T, 2H) scratch: [h_f[B-1] | h_b[B-1]] per timestep
                  *, T, B, H):
    G = 4 * H

    # Hoisted input projection for both directions: one well-shaped matmul,
    # bias already folded in.  gx[t*B:(t+1)*B] are the input gates at time t.
    gx = (jnp.dot(x_ref[...], wih_ref[...], preferred_element_type=jnp.float32)
          + b_ref[...])                                    # (T*B, 8H)

    whh = whh_ref[...]                                     # (2H, 8H)

    def lstm_step(gates, c):
        i_g = jax.nn.sigmoid(gates[:, 0:H])
        f_g = jax.nn.sigmoid(gates[:, H:2 * H])
        g_g = jnp.tanh(gates[:, 2 * H:3 * H])
        o_g = jax.nn.sigmoid(gates[:, 3 * H:4 * H])
        c_new = f_g * c + i_g * g_g
        h_new = o_g * jnp.tanh(c_new)
        return h_new, c_new

    h_f = jnp.zeros((B, H), jnp.float32)
    c_f = jnp.zeros((B, H), jnp.float32)
    h_b = jnp.zeros((B, H), jnp.float32)
    c_b = jnp.zeros((B, H), jnp.float32)

    # Fused fwd/rev recurrence, fully unrolled (T is static and small): one
    # block-diagonal recurrent matmul produces both directions' gates per step.
    for t in range(T):
        t_r = T - 1 - t
        h_cat = jnp.concatenate([h_f, h_b], axis=-1)       # (B, 2H)
        rec = jnp.dot(h_cat, whh, preferred_element_type=jnp.float32)  # (B, 8H)
        gates_f = gx[t * B:(t + 1) * B, 0:G] + rec[:, 0:G]
        gates_b = gx[t_r * B:(t_r + 1) * B, G:2 * G] + rec[:, G:2 * G]
        h_f, c_f = lstm_step(gates_f, c_f)
        h_b, c_b = lstm_step(gates_b, c_b)
        # Only batch row B-1 is consumed downstream (output[:, -1, :] semantics).
        feat_scr[t:t + 1, 0:H] = h_f[B - 1:B, :]
        feat_scr[t_r:t_r + 1, H:2 * H] = h_b[B - 1:B, :]

    # fc head: (T, 2H) x (2H, 1) as a VPU multiply + lane reduction (an N=1 MXU
    # matmul would waste the MXU and round-trip the result FIFO).
    feat = feat_scr[...]
    out_ref[...] = (jnp.sum(feat * fcw_ref[...], axis=-1, keepdims=True)
                    + fcb_ref[...])


def bilstm_forward(x, params):
    T, B, I = x.shape
    H = params["whh_f"].shape[1]            # whh is (4H, H)
    G = 4 * H
    f32 = jnp.float32

    # Plain-JAX glue: pre-transpose / fuse PyTorch-layout weights.
    wih_cat = jnp.concatenate([params["wih_f"].T, params["wih_r"].T],
                              axis=1).astype(f32)                    # (I, 8H)
    b_cat = jnp.concatenate([params["bih_f"] + params["bhh_f"],
                             params["bih_r"] + params["bhh_r"]]
                            ).reshape(1, 2 * G).astype(f32)          # (1, 8H)
    whh_blk = jnp.zeros((2 * H, 2 * G), f32)                         # (2H, 8H)
    whh_blk = whh_blk.at[:H, :G].set(params["whh_f"].T)
    whh_blk = whh_blk.at[H:, G:].set(params["whh_r"].T)

    fcw = params["fc_w"].reshape(1, 2 * H).astype(f32)
    fcb = params["fc_b"].reshape(1, 1).astype(f32)

    x2d = x.reshape(T * B, I).astype(f32)

    vmem = pl.BlockSpec(memory_space=pltpu.MemorySpace.VMEM)
    kernel = functools.partial(bilstm_kernel, T=T, B=B, H=H)
    return pl.pallas_call(
        kernel,
        out_shape=jax.ShapeDtypeStruct((T, 1), jnp.float32),
        in_specs=[vmem] * 6,
        out_specs=vmem,
        scratch_shapes=[pltpu.VMEM((T, 2 * H), jnp.float32)],
    )(x2d, wih_cat, whh_blk, b_cat, fcw, fcb)


def bilstm_reference(x, params):
    """Pure-JAX reference of the PyTorch forward, for correctness checking."""
    T, B, I = x.shape
    H = params["whh_f"].shape[1]
    hp = lax.Precision.HIGHEST

    def run_dir(wih, whh, bih, bhh, reverse):
        b = bih + bhh
        h = jnp.zeros((B, H), jnp.float32)
        c = jnp.zeros((B, H), jnp.float32)
        ts = range(T - 1, -1, -1) if reverse else range(T)
        outs = [None] * T
        for t in ts:
            gates = (jnp.dot(x[t], wih.T, precision=hp)
                     + jnp.dot(h, whh.T, precision=hp) + b)
            i_g = jax.nn.sigmoid(gates[:, 0:H])
            f_g = jax.nn.sigmoid(gates[:, H:2 * H])
            g_g = jnp.tanh(gates[:, 2 * H:3 * H])
            o_g = jax.nn.sigmoid(gates[:, 3 * H:4 * H])
            c = f_g * c + i_g * g_g
            h = o_g * jnp.tanh(c)
            outs[t] = h
        return jnp.stack(outs, axis=0)                    # (T, B, H)

    hf = run_dir(params["wih_f"], params["whh_f"], params["bih_f"], params["bhh_f"], False)
    hb = run_dir(params["wih_r"], params["whh_r"], params["bih_r"], params["bhh_r"], True)
    out = jnp.concatenate([hf, hb], axis=-1)              # (T, B, 2H)
    feat = out[:, -1, :]                                  # (T, 2H)  (same indexing as PyTorch code)
    return jnp.dot(feat, params["fc_w"].T, precision=hp) + params["fc_b"]


def init_params(key, input_size, hidden_size):
    H, I = hidden_size, input_size
    k = 1.0 / jnp.sqrt(H)
    keys = jax.random.split(key, 10)
    u = lambda kk, shape: jax.random.uniform(kk, shape, jnp.float32, -k, k)
    return {
        "wih_f": u(keys[0], (4 * H, I)),
        "whh_f": u(keys[1], (4 * H, H)),
        "bih_f": u(keys[2], (4 * H,)),
        "bhh_f": u(keys[3], (4 * H,)),
        "wih_r": u(keys[4], (4 * H, I)),
        "whh_r": u(keys[5], (4 * H, H)),
        "bih_r": u(keys[6], (4 * H,)),
        "bhh_r": u(keys[7], (4 * H,)),
        "fc_w":  u(keys[8], (1, 2 * H)),
        "fc_b":  u(keys[9], (1,)),
    }


if __name__ == "__main__":
    T, B, I, H = 8, 2, 16, 32       # seq, batch, input_size, hidden_size
    key = jax.random.PRNGKey(0)
    kx, kp = jax.random.split(key)
    x = jax.random.normal(kx, (T, B, I), jnp.float32)
    params = init_params(kp, I, H)

    out = jax.block_until_ready(bilstm_forward(x, params))
    assert out.shape == (T, 1), out.shape

    ref = jax.block_until_ready(bilstm_reference(x, params))
    assert jnp.allclose(out, ref, rtol=2e-3, atol=2e-3), (out, ref)

    print("KERNEL_OK")
</pallas_src>

<mosaic_0001>
module attributes {stable_mosaic.version = 11 : i64} {
  func.func @bilstm_kernel(%arg0: memref<16x16xf32, #tpu.memory_space<vmem>>, %arg1: memref<16x256xf32, #tpu.memory_space<vmem>>, %arg2: memref<64x256xf32, #tpu.memory_space<vmem>>, %arg3: memref<1x256xf32, #tpu.memory_space<vmem>>, %arg4: memref<1x64xf32, #tpu.memory_space<vmem>>, %arg5: memref<1x1xf32, #tpu.memory_space<vmem>>, %arg6: memref<8x1xf32, #tpu.memory_space<vmem>>, %arg7: memref<8x64xf32, #tpu.memory_space<vmem>>) attributes {dimension_semantics = [], scalar_prefetch = 0 : i64, scratch_operands = 1 : i64, tpu.core_type = #tpu.core_type<tc>} {
    %c0 = arith.constant 0 : index
    %c0_0 = arith.constant 0 : index
    %0 = vector.load %arg0[%c0, %c0_0] : memref<16x16xf32, #tpu.memory_space<vmem>>, vector<16x16xf32>
    %c0_1 = arith.constant 0 : index
    %c0_2 = arith.constant 0 : index
    %1 = vector.load %arg1[%c0_1, %c0_2] : memref<16x256xf32, #tpu.memory_space<vmem>>, vector<16x256xf32>
    %cst = arith.constant dense<0.000000e+00> : vector<16x256xf32>
    %2 = tpu.matmul %0, %1, %cst {dimension_numbers = #tpu.dot_dimension_numbers<[1], [0], [0], [1], [0, 0, 1, 1], [], []>} : vector<16x16xf32>, vector<16x256xf32>, vector<16x256xf32> -> vector<16x256xf32>
    %c0_3 = arith.constant 0 : index
    %c0_4 = arith.constant 0 : index
    %3 = vector.load %arg3[%c0_3, %c0_4] : memref<1x256xf32, #tpu.memory_space<vmem>>, vector<1x256xf32>
    %4 = vector.broadcast %3 : vector<1x256xf32> to vector<16x256xf32>
    %5 = arith.addf %2, %4 : vector<16x256xf32>
    %c0_5 = arith.constant 0 : index
    %c0_6 = arith.constant 0 : index
    %6 = vector.load %arg2[%c0_5, %c0_6] : memref<64x256xf32, #tpu.memory_space<vmem>>, vector<64x256xf32>
    %cst_7 = arith.constant 0.000000e+00 : f32
    %7 = vector.broadcast %cst_7 : f32 to vector<2x32xf32>
    %cst_8 = arith.constant 0.000000e+00 : f32
    %8 = vector.broadcast %cst_8 : f32 to vector<2x32xf32>
    %cst_9 = arith.constant 0.000000e+00 : f32
    %9 = vector.broadcast %cst_9 : f32 to vector<2x32xf32>
    %cst_10 = arith.constant 0.000000e+00 : f32
    %10 = vector.broadcast %cst_10 : f32 to vector<2x32xf32>
    %11 = tpu.concatenate %7, %9 in 1 : vector<2x32xf32>, vector<2x32xf32> -> vector<2x64xf32>
    %cst_11 = arith.constant dense<0.000000e+00> : vector<2x256xf32>
    %12 = tpu.matmul %11, %6, %cst_11 {dimension_numbers = #tpu.dot_dimension_numbers<[1], [0], [0], [1], [0, 0, 1, 1], [], []>} : vector<2x64xf32>, vector<64x256xf32>, vector<2x256xf32> -> vector<2x256xf32>
    %13 = vector.extract_strided_slice %5 {offsets = [0, 0], sizes = [2, 128], strides = [1, 1]} : vector<16x256xf32> to vector<2x128xf32>
    %14 = vector.extract_strided_slice %12 {offsets = [0, 0], sizes = [2, 128], strides = [1, 1]} : vector<2x256xf32> to vector<2x128xf32>
    %15 = arith.addf %13, %14 : vector<2x128xf32>
    %16 = vector.extract_strided_slice %5 {offsets = [14, 128], sizes = [2, 128], strides = [1, 1]} : vector<16x256xf32> to vector<2x128xf32>
    %17 = vector.extract_strided_slice %12 {offsets = [0, 128], sizes = [2, 128], strides = [1, 1]} : vector<2x256xf32> to vector<2x128xf32>
    %18 = arith.addf %16, %17 : vector<2x128xf32>
    %19 = vector.extract_strided_slice %15 {offsets = [0, 0], sizes = [2, 32], strides = [1, 1]} : vector<2x128xf32> to vector<2x32xf32>
    %20 = arith.negf %19 : vector<2x32xf32>
    %21 = math.exp %20 : vector<2x32xf32>
    %cst_12 = arith.constant 1.000000e+00 : f32
    %22 = vector.broadcast %cst_12 : f32 to vector<2x32xf32>
    %23 = arith.addf %22, %21 : vector<2x32xf32>
    %24 = arith.divf %22, %23 : vector<2x32xf32>
    %25 = vector.extract_strided_slice %15 {offsets = [0, 32], sizes = [2, 32], strides = [1, 1]} : vector<2x128xf32> to vector<2x32xf32>
    %26 = arith.negf %25 : vector<2x32xf32>
    %27 = math.exp %26 : vector<2x32xf32>
    %cst_13 = arith.constant 1.000000e+00 : f32
    %28 = vector.broadcast %cst_13 : f32 to vector<2x32xf32>
    %29 = arith.addf %28, %27 : vector<2x32xf32>
    %30 = arith.divf %28, %29 : vector<2x32xf32>
    %31 = vector.extract_strided_slice %15 {offsets = [0, 64], sizes = [2, 32], strides = [1, 1]} : vector<2x128xf32> to vector<2x32xf32>
    %32 = math.tanh %31 : vector<2x32xf32>
    %33 = vector.extract_strided_slice %15 {offsets = [0, 96], sizes = [2, 32], strides = [1, 1]} : vector<2x128xf32> to vector<2x32xf32>
    %34 = arith.negf %33 : vector<2x32xf32>
    %35 = math.exp %34 : vector<2x32xf32>
    %cst_14 = arith.constant 1.000000e+00 : f32
    %36 = vector.broadcast %cst_14 : f32 to vector<2x32xf32>
    %37 = arith.addf %36, %35 : vector<2x32xf32>
    %38 = arith.divf %36, %37 : vector<2x32xf32>
    %39 = arith.mulf %30, %8 : vector<2x32xf32>
    %40 = arith.mulf %24, %32 : vector<2x32xf32>
    %41 = arith.addf %39, %40 : vector<2x32xf32>
    %42 = math.tanh %41 : vector<2x32xf32>
    %43 = arith.mulf %38, %42 : vector<2x32xf32>
    %44 = vector.extract_strided_slice %18 {offsets = [0, 0], sizes = [2, 32], strides = [1, 1]} : vector<2x128xf32> to vector<2x32xf32>
    %45 = arith.negf %44 : vector<2x32xf32>
    %46 = math.exp %45 : vector<2x32xf32>
    %cst_15 = arith.constant 1.000000e+00 : f32
    %47 = vector.broadcast %cst_15 : f32 to vector<2x32xf32>
    %48 = arith.addf %47, %46 : vector<2x32xf32>
    %49 = arith.divf %47, %48 : vector<2x32xf32>
    %50 = vector.extract_strided_slice %18 {offsets = [0, 32], sizes = [2, 32], strides = [1, 1]} : vector<2x128xf32> to vector<2x32xf32>
    %51 = arith.negf %50 : vector<2x32xf32>
    %52 = math.exp %51 : vector<2x32xf32>
    %cst_16 = arith.constant 1.000000e+00 : f32
    %53 = vector.broadcast %cst_16 : f32 to vector<2x32xf32>
    %54 = arith.addf %53, %52 : vector<2x32xf32>
    %55 = arith.divf %53, %54 : vector<2x32xf32>
    %56 = vector.extract_strided_slice %18 {offsets = [0, 64], sizes = [2, 32], strides = [1, 1]} : vector<2x128xf32> to vector<2x32xf32>
    %57 = math.tanh %56 : vector<2x32xf32>
    %58 = vector.extract_strided_slice %18 {offsets = [0, 96], sizes = [2, 32], strides = [1, 1]} : vector<2x128xf32> to vector<2x32xf32>
    %59 = arith.negf %58 : vector<2x32xf32>
    %60 = math.exp %59 : vector<2x32xf32>
    %cst_17 = arith.constant 1.000000e+00 : f32
    %61 = vector.broadcast %cst_17 : f32 to vector<2x32xf32>
    %62 = arith.addf %61, %60 : vector<2x32xf32>
    %63 = arith.divf %61, %62 : vector<2x32xf32>
    %64 = arith.mulf %55, %10 : vector<2x32xf32>
    %65 = arith.mulf %49, %57 : vector<2x32xf32>
    %66 = arith.addf %64, %65 : vector<2x32xf32>
    %67 = math.tanh %66 : vector<2x32xf32>
    %68 = arith.mulf %63, %67 : vector<2x32xf32>
    %69 = vector.extract_strided_slice %43 {offsets = [1, 0], sizes = [1, 32], strides = [1, 1]} : vector<2x32xf32> to vector<1x32xf32>
    %c0_18 = arith.constant 0 : index
    %c0_19 = arith.constant 0 : index
    %70 = vector.load %arg7[%c0_18, %c0_19] : memref<8x64xf32, #tpu.memory_space<vmem>>, vector<1x32xf32>
    tpu.vector_store %arg7[%c0_18, %c0_19], %69 {strides = array<i32>} : memref<8x64xf32, #tpu.memory_space<vmem>>, vector<1x32xf32>,
    %71 = vector.extract_strided_slice %68 {offsets = [1, 0], sizes = [1, 32], strides = [1, 1]} : vector<2x32xf32> to vector<1x32xf32>
    %c7 = arith.constant 7 : index
    %c32 = arith.constant 32 : index
    %72 = vector.load %arg7[%c7, %c32] : memref<8x64xf32, #tpu.memory_space<vmem>>, vector<1x32xf32>
    tpu.vector_store %arg7[%c7, %c32], %71 {strides = array<i32>} : memref<8x64xf32, #tpu.memory_space<vmem>>, vector<1x32xf32>,
    %73 = tpu.concatenate %43, %68 in 1 : vector<2x32xf32>, vector<2x32xf32> -> vector<2x64xf32>
    %cst_20 = arith.constant dense<0.000000e+00> : vector<2x256xf32>
    %74 = tpu.matmul %73, %6, %cst_20 {dimension_numbers = #tpu.dot_dimension_numbers<[1], [0], [0], [1], [0, 0, 1, 1], [], []>} : vector<2x64xf32>, vector<64x256xf32>, vector<2x256xf32> -> vector<2x256xf32>
    %75 = vector.extract_strided_slice %5 {offsets = [2, 0], sizes = [2, 128], strides = [1, 1]} : vector<16x256xf32> to vector<2x128xf32>
    %76 = vector.extract_strided_slice %74 {offsets = [0, 0], sizes = [2, 128], strides = [1, 1]} : vector<2x256xf32> to vector<2x128xf32>
    %77 = arith.addf %75, %76 : vector<2x128xf32>
    %78 = vector.extract_strided_slice %5 {offsets = [12, 128], sizes = [2, 128], strides = [1, 1]} : vector<16x256xf32> to vector<2x128xf32>
    %79 = vector.extract_strided_slice %74 {offsets = [0, 128], sizes = [2, 128], strides = [1, 1]} : vector<2x256xf32> to vector<2x128xf32>
    %80 = arith.addf %78, %79 : vector<2x128xf32>
    %81 = vector.extract_strided_slice %77 {offsets = [0, 0], sizes = [2, 32], strides = [1, 1]} : vector<2x128xf32> to vector<2x32xf32>
    %82 = arith.negf %81 : vector<2x32xf32>
    %83 = math.exp %82 : vector<2x32xf32>
    %cst_21 = arith.constant 1.000000e+00 : f32
    %84 = vector.broadcast %cst_21 : f32 to vector<2x32xf32>
    %85 = arith.addf %84, %83 : vector<2x32xf32>
    %86 = arith.divf %84, %85 : vector<2x32xf32>
    %87 = vector.extract_strided_slice %77 {offsets = [0, 32], sizes = [2, 32], strides = [1, 1]} : vector<2x128xf32> to vector<2x32xf32>
    %88 = arith.negf %87 : vector<2x32xf32>
    %89 = math.exp %88 : vector<2x32xf32>
    %cst_22 = arith.constant 1.000000e+00 : f32
    %90 = vector.broadcast %cst_22 : f32 to vector<2x32xf32>
    %91 = arith.addf %90, %89 : vector<2x32xf32>
    %92 = arith.divf %90, %91 : vector<2x32xf32>
    %93 = vector.extract_strided_slice %77 {offsets = [0, 64], sizes = [2, 32], strides = [1, 1]} : vector<2x128xf32> to vector<2x32xf32>
    %94 = math.tanh %93 : vector<2x32xf32>
    %95 = vector.extract_strided_slice %77 {offsets = [0, 96], sizes = [2, 32], strides = [1, 1]} : vector<2x128xf32> to vector<2x32xf32>
    %96 = arith.negf %95 : vector<2x32xf32>
    %97 = math.exp %96 : vector<2x32xf32>
    %cst_23 = arith.constant 1.000000e+00 : f32
    %98 = vector.broadcast %cst_23 : f32 to vector<2x32xf32>
    %99 = arith.addf %98, %97 : vector<2x32xf32>
    %100 = arith.divf %98, %99 : vector<2x32xf32>
    %101 = arith.mulf %92, %41 : vector<2x32xf32>
    %102 = arith.mulf %86, %94 : vector<2x32xf32>
    %103 = arith.addf %101, %102 : vector<2x32xf32>
    %104 = math.tanh %103 : vector<2x32xf32>
    %105 = arith.mulf %100, %104 : vector<2x32xf32>
    %106 = vector.extract_strided_slice %80 {offsets = [0, 0], sizes = [2, 32], strides = [1, 1]} : vector<2x128xf32> to vector<2x32xf32>
    %107 = arith.negf %106 : vector<2x32xf32>
    %108 = math.exp %107 : vector<2x32xf32>
    %cst_24 = arith.constant 1.000000e+00 : f32
    %109 = vector.broadcast %cst_24 : f32 to vector<2x32xf32>
    %110 = arith.addf %109, %108 : vector<2x32xf32>
    %111 = arith.divf %109, %110 : vector<2x32xf32>
    %112 = vector.extract_strided_slice %80 {offsets = [0, 32], sizes = [2, 32], strides = [1, 1]} : vector<2x128xf32> to vector<2x32xf32>
    %113 = arith.negf %112 : vector<2x32xf32>
    %114 = math.exp %113 : vector<2x32xf32>
    %cst_25 = arith.constant 1.000000e+00 : f32
    %115 = vector.broadcast %cst_25 : f32 to vector<2x32xf32>
    %116 = arith.addf %115, %114 : vector<2x32xf32>
    %117 = arith.divf %115, %116 : vector<2x32xf32>
    %118 = vector.extract_strided_slice %80 {offsets = [0, 64], sizes = [2, 32], strides = [1, 1]} : vector<2x128xf32> to vector<2x32xf32>
    %119 = math.tanh %118 : vector<2x32xf32>
    %120 = vector.extract_strided_slice %80 {offsets = [0, 96], sizes = [2, 32], strides = [1, 1]} : vector<2x128xf32> to vector<2x32xf32>
    %121 = arith.negf %120 : vector<2x32xf32>
    %122 = math.exp %121 : vector<2x32xf32>
    %cst_26 = arith.constant 1.000000e+00 : f32
    %123 = vector.broadcast %cst_26 : f32 to vector<2x32xf32>
    %124 = arith.addf %123, %122 : vector<2x32xf32>
    %125 = arith.divf %123, %124 : vector<2x32xf32>
    %126 = arith.mulf %117, %66 : vector<2x32xf32>
    %127 = arith.mulf %111, %119 : vector<2x32xf32>
    %128 = arith.addf %126, %127 : vector<2x32xf32>
    %129 = math.tanh %128 : vector<2x32xf32>
    %130 = arith.mulf %125, %129 : vector<2x32xf32>
    %131 = vector.extract_strided_slice %105 {offsets = [1, 0], sizes = [1, 32], strides = [1, 1]} : vector<2x32xf32> to vector<1x32xf32>
    %c1 = arith.constant 1 : index
    %c0_27 = arith.constant 0 : index
    %132 = vector.load %arg7[%c1, %c0_27] : memref<8x64xf32, #tpu.memory_space<vmem>>, vector<1x32xf32>
    tpu.vector_store %arg7[%c1, %c0_27], %131 {strides = array<i32>} : memref<8x64xf32, #tpu.memory_space<vmem>>, vector<1x32xf32>,
    %133 = vector.extract_strided_slice %130 {offsets = [1, 0], sizes = [1, 32], strides = [1, 1]} : vector<2x32xf32> to vector<1x32xf32>
    %c6 = arith.constant 6 : index
    %c32_28 = arith.constant 32 : index
    %134 = vector.load %arg7[%c6, %c32_28] : memref<8x64xf32, #tpu.memory_space<vmem>>, vector<1x32xf32>
    tpu.vector_store %arg7[%c6, %c32_28], %133 {strides = array<i32>} : memref<8x64xf32, #tpu.memory_space<vmem>>, vector<1x32xf32>,
    %135 = tpu.concatenate %105, %130 in 1 : vector<2x32xf32>, vector<2x32xf32> -> vector<2x64xf32>
    %cst_29 = arith.constant dense<0.000000e+00> : vector<2x256xf32>
    %136 = tpu.matmul %135, %6, %cst_29 {dimension_numbers = #tpu.dot_dimension_numbers<[1], [0], [0], [1], [0, 0, 1, 1], [], []>} : vector<2x64xf32>, vector<64x256xf32>, vector<2x256xf32> -> vector<2x256xf32>
    %137 = vector.extract_strided_slice %5 {offsets = [4, 0], sizes = [2, 128], strides = [1, 1]} : vector<16x256xf32> to vector<2x128xf32>
    %138 = vector.extract_strided_slice %136 {offsets = [0, 0], sizes = [2, 128], strides = [1, 1]} : vector<2x256xf32> to vector<2x128xf32>
    %139 = arith.addf %137, %138 : vector<2x128xf32>
    %140 = vector.extract_strided_slice %5 {offsets = [10, 128], sizes = [2, 128], strides = [1, 1]} : vector<16x256xf32> to vector<2x128xf32>
    %141 = vector.extract_strided_slice %136 {offsets = [0, 128], sizes = [2, 128], strides = [1, 1]} : vector<2x256xf32> to vector<2x128xf32>
    %142 = arith.addf %140, %141 : vector<2x128xf32>
    %143 = vector.extract_strided_slice %139 {offsets = [0, 0], sizes = [2, 32], strides = [1, 1]} : vector<2x128xf32> to vector<2x32xf32>
    %144 = arith.negf %143 : vector<2x32xf32>
    %145 = math.exp %144 : vector<2x32xf32>
    %cst_30 = arith.constant 1.000000e+00 : f32
    %146 = vector.broadcast %cst_30 : f32 to vector<2x32xf32>
    %147 = arith.addf %146, %145 : vector<2x32xf32>
    %148 = arith.divf %146, %147 : vector<2x32xf32>
    %149 = vector.extract_strided_slice %139 {offsets = [0, 32], sizes = [2, 32], strides = [1, 1]} : vector<2x128xf32> to vector<2x32xf32>
    %150 = arith.negf %149 : vector<2x32xf32>
    %151 = math.exp %150 : vector<2x32xf32>
    %cst_31 = arith.constant 1.000000e+00 : f32
    %152 = vector.broadcast %cst_31 : f32 to vector<2x32xf32>
    %153 = arith.addf %152, %151 : vector<2x32xf32>
    %154 = arith.divf %152, %153 : vector<2x32xf32>
    %155 = vector.extract_strided_slice %139 {offsets = [0, 64], sizes = [2, 32], strides = [1, 1]} : vector<2x128xf32> to vector<2x32xf32>
    %156 = math.tanh %155 : vector<2x32xf32>
    %157 = vector.extract_strided_slice %139 {offsets = [0, 96], sizes = [2, 32], strides = [1, 1]} : vector<2x128xf32> to vector<2x32xf32>
    %158 = arith.negf %157 : vector<2x32xf32>
    %159 = math.exp %158 : vector<2x32xf32>
    %cst_32 = arith.constant 1.000000e+00 : f32
    %160 = vector.broadcast %cst_32 : f32 to vector<2x32xf32>
    %161 = arith.addf %160, %159 : vector<2x32xf32>
    %162 = arith.divf %160, %161 : vector<2x32xf32>
    %163 = arith.mulf %154, %103 : vector<2x32xf32>
    %164 = arith.mulf %148, %156 : vector<2x32xf32>
    %165 = arith.addf %163, %164 : vector<2x32xf32>
    %166 = math.tanh %165 : vector<2x32xf32>
    %167 = arith.mulf %162, %166 : vector<2x32xf32>
    %168 = vector.extract_strided_slice %142 {offsets = [0, 0], sizes = [2, 32], strides = [1, 1]} : vector<2x128xf32> to vector<2x32xf32>
    %169 = arith.negf %168 : vector<2x32xf32>
    %170 = math.exp %169 : vector<2x32xf32>
    %cst_33 = arith.constant 1.000000e+00 : f32
    %171 = vector.broadcast %cst_33 : f32 to vector<2x32xf32>
    %172 = arith.addf %171, %170 : vector<2x32xf32>
    %173 = arith.divf %171, %172 : vector<2x32xf32>
    %174 = vector.extract_strided_slice %142 {offsets = [0, 32], sizes = [2, 32], strides = [1, 1]} : vector<2x128xf32> to vector<2x32xf32>
    %175 = arith.negf %174 : vector<2x32xf32>
    %176 = math.exp %175 : vector<2x32xf32>
    %cst_34 = arith.constant 1.000000e+00 : f32
    %177 = vector.broadcast %cst_34 : f32 to vector<2x32xf32>
    %178 = arith.addf %177, %176 : vector<2x32xf32>
    %179 = arith.divf %177, %178 : vector<2x32xf32>
    %180 = vector.extract_strided_slice %142 {offsets = [0, 64], sizes = [2, 32], strides = [1, 1]} : vector<2x128xf32> to vector<2x32xf32>
    %181 = math.tanh %180 : vector<2x32xf32>
    %182 = vector.extract_strided_slice %142 {offsets = [0, 96], sizes = [2, 32], strides = [1, 1]} : vector<2x128xf32> to vector<2x32xf32>
    %183 = arith.negf %182 : vector<2x32xf32>
    %184 = math.exp %183 : vector<2x32xf32>
    %cst_35 = arith.constant 1.000000e+00 : f32
    %185 = vector.broadcast %cst_35 : f32 to vector<2x32xf32>
    %186 = arith.addf %185, %184 : vector<2x32xf32>
    %187 = arith.divf %185, %186 : vector<2x32xf32>
    %188 = arith.mulf %179, %128 : vector<2x32xf32>
    %189 = arith.mulf %173, %181 : vector<2x32xf32>
    %190 = arith.addf %188, %189 : vector<2x32xf32>
    %191 = math.tanh %190 : vector<2x32xf32>
    %192 = arith.mulf %187, %191 : vector<2x32xf32>
    %193 = vector.extract_strided_slice %167 {offsets = [1, 0], sizes = [1, 32], strides = [1, 1]} : vector<2x32xf32> to vector<1x32xf32>
    %c2 = arith.constant 2 : index
    %c0_36 = arith.constant 0 : index
    %194 = vector.load %arg7[%c2, %c0_36] : memref<8x64xf32, #tpu.memory_space<vmem>>, vector<1x32xf32>
    tpu.vector_store %arg7[%c2, %c0_36], %193 {strides = array<i32>} : memref<8x64xf32, #tpu.memory_space<vmem>>, vector<1x32xf32>,
    %195 = vector.extract_strided_slice %192 {offsets = [1, 0], sizes = [1, 32], strides = [1, 1]} : vector<2x32xf32> to vector<1x32xf32>
    %c5 = arith.constant 5 : index
    %c32_37 = arith.constant 32 : index
    %196 = vector.load %arg7[%c5, %c32_37] : memref<8x64xf32, #tpu.memory_space<vmem>>, vector<1x32xf32>
    tpu.vector_store %arg7[%c5, %c32_37], %195 {strides = array<i32>} : memref<8x64xf32, #tpu.memory_space<vmem>>, vector<1x32xf32>,
    %197 = tpu.concatenate %167, %192 in 1 : vector<2x32xf32>, vector<2x32xf32> -> vector<2x64xf32>
    %cst_38 = arith.constant dense<0.000000e+00> : vector<2x256xf32>
    %198 = tpu.matmul %197, %6, %cst_38 {dimension_numbers = #tpu.dot_dimension_numbers<[1], [0], [0], [1], [0, 0, 1, 1], [], []>} : vector<2x64xf32>, vector<64x256xf32>, vector<2x256xf32> -> vector<2x256xf32>
    %199 = vector.extract_strided_slice %5 {offsets = [6, 0], sizes = [2, 128], strides = [1, 1]} : vector<16x256xf32> to vector<2x128xf32>
    %200 = vector.extract_strided_slice %198 {offsets = [0, 0], sizes = [2, 128], strides = [1, 1]} : vector<2x256xf32> to vector<2x128xf32>
    %201 = arith.addf %199, %200 : vector<2x128xf32>
    %202 = vector.extract_strided_slice %5 {offsets = [8, 128], sizes = [2, 128], strides = [1, 1]} : vector<16x256xf32> to vector<2x128xf32>
    %203 = vector.extract_strided_slice %198 {offsets = [0, 128], sizes = [2, 128], strides = [1, 1]} : vector<2x256xf32> to vector<2x128xf32>
    %204 = arith.addf %202, %203 : vector<2x128xf32>
    %205 = vector.extract_strided_slice %201 {offsets = [0, 0], sizes = [2, 32], strides = [1, 1]} : vector<2x128xf32> to vector<2x32xf32>
    %206 = arith.negf %205 : vector<2x32xf32>
    %207 = math.exp %206 : vector<2x32xf32>
    %cst_39 = arith.constant 1.000000e+00 : f32
    %208 = vector.broadcast %cst_39 : f32 to vector<2x32xf32>
    %209 = arith.addf %208, %207 : vector<2x32xf32>
    %210 = arith.divf %208, %209 : vector<2x32xf32>
    %211 = vector.extract_strided_slice %201 {offsets = [0, 32], sizes = [2, 32], strides = [1, 1]} : vector<2x128xf32> to vector<2x32xf32>
    %212 = arith.negf %211 : vector<2x32xf32>
    %213 = math.exp %212 : vector<2x32xf32>
    %cst_40 = arith.constant 1.000000e+00 : f32
    %214 = vector.broadcast %cst_40 : f32 to vector<2x32xf32>
    %215 = arith.addf %214, %213 : vector<2x32xf32>
    %216 = arith.divf %214, %215 : vector<2x32xf32>
    %217 = vector.extract_strided_slice %201 {offsets = [0, 64], sizes = [2, 32], strides = [1, 1]} : vector<2x128xf32> to vector<2x32xf32>
    %218 = math.tanh %217 : vector<2x32xf32>
    %219 = vector.extract_strided_slice %201 {offsets = [0, 96], sizes = [2, 32], strides = [1, 1]} : vector<2x128xf32> to vector<2x32xf32>
    %220 = arith.negf %219 : vector<2x32xf32>
    %221 = math.exp %220 : vector<2x32xf32>
    %cst_41 = arith.constant 1.000000e+00 : f32
    %222 = vector.broadcast %cst_41 : f32 to vector<2x32xf32>
    %223 = arith.addf %222, %221 : vector<2x32xf32>
    %224 = arith.divf %222, %223 : vector<2x32xf32>
    %225 = arith.mulf %216, %165 : vector<2x32xf32>
    %226 = arith.mulf %210, %218 : vector<2x32xf32>
    %227 = arith.addf %225, %226 : vector<2x32xf32>
    %228 = math.tanh %227 : vector<2x32xf32>
    %229 = arith.mulf %224, %228 : vector<2x32xf32>
    %230 = vector.extract_strided_slice %204 {offsets = [0, 0], sizes = [2, 32], strides = [1, 1]} : vector<2x128xf32> to vector<2x32xf32>
    %231 = arith.negf %230 : vector<2x32xf32>
    %232 = math.exp %231 : vector<2x32xf32>
    %cst_42 = arith.constant 1.000000e+00 : f32
    %233 = vector.broadcast %cst_42 : f32 to vector<2x32xf32>
    %234 = arith.addf %233, %232 : vector<2x32xf32>
    %235 = arith.divf %233, %234 : vector<2x32xf32>
    %236 = vector.extract_strided_slice %204 {offsets = [0, 32], sizes = [2, 32], strides = [1, 1]} : vector<2x128xf32> to vector<2x32xf32>
    %237 = arith.negf %236 : vector<2x32xf32>
    %238 = math.exp %237 : vector<2x32xf32>
    %cst_43 = arith.constant 1.000000e+00 : f32
    %239 = vector.broadcast %cst_43 : f32 to vector<2x32xf32>
    %240 = arith.addf %239, %238 : vector<2x32xf32>
    %241 = arith.divf %239, %240 : vector<2x32xf32>
    %242 = vector.extract_strided_slice %204 {offsets = [0, 64], sizes = [2, 32], strides = [1, 1]} : vector<2x128xf32> to vector<2x32xf32>
    %243 = math.tanh %242 : vector<2x32xf32>
    %244 = vector.extract_strided_slice %204 {offsets = [0, 96], sizes = [2, 32], strides = [1, 1]} : vector<2x128xf32> to vector<2x32xf32>
    %245 = arith.negf %244 : vector<2x32xf32>
    %246 = math.exp %245 : vector<2x32xf32>
    %cst_44 = arith.constant 1.000000e+00 : f32
    %247 = vector.broadcast %cst_44 : f32 to vector<2x32xf32>
    %248 = arith.addf %247, %246 : vector<2x32xf32>
    %249 = arith.divf %247, %248 : vector<2x32xf32>
    %250 = arith.mulf %241, %190 : vector<2x32xf32>
    %251 = arith.mulf %235, %243 : vector<2x32xf32>
    %252 = arith.addf %250, %251 : vector<2x32xf32>
    %253 = math.tanh %252 : vector<2x32xf32>
    %254 = arith.mulf %249, %253 : vector<2x32xf32>
    %255 = vector.extract_strided_slice %229 {offsets = [1, 0], sizes = [1, 32], strides = [1, 1]} : vector<2x32xf32> to vector<1x32xf32>
    %c3 = arith.constant 3 : index
    %c0_45 = arith.constant 0 : index
    %256 = vector.load %arg7[%c3, %c0_45] : memref<8x64xf32, #tpu.memory_space<vmem>>, vector<1x32xf32>
    tpu.vector_store %arg7[%c3, %c0_45], %255 {strides = array<i32>} : memref<8x64xf32, #tpu.memory_space<vmem>>, vector<1x32xf32>,
    %257 = vector.extract_strided_slice %254 {offsets = [1, 0], sizes = [1, 32], strides = [1, 1]} : vector<2x32xf32> to vector<1x32xf32>
    %c4 = arith.constant 4 : index
    %c32_46 = arith.constant 32 : index
    %258 = vector.load %arg7[%c4, %c32_46] : memref<8x64xf32, #tpu.memory_space<vmem>>, vector<1x32xf32>
    tpu.vector_store %arg7[%c4, %c32_46], %257 {strides = array<i32>} : memref<8x64xf32, #tpu.memory_space<vmem>>, vector<1x32xf32>,
    %259 = tpu.concatenate %229, %254 in 1 : vector<2x32xf32>, vector<2x32xf32> -> vector<2x64xf32>
    %cst_47 = arith.constant dense<0.000000e+00> : vector<2x256xf32>
    %260 = tpu.matmul %259, %6, %cst_47 {dimension_numbers = #tpu.dot_dimension_numbers<[1], [0], [0], [1], [0, 0, 1, 1], [], []>} : vector<2x64xf32>, vector<64x256xf32>, vector<2x256xf32> -> vector<2x256xf32>
    %261 = vector.extract_strided_slice %5 {offsets = [8, 0], sizes = [2, 128], strides = [1, 1]} : vector<16x256xf32> to vector<2x128xf32>
    %262 = vector.extract_strided_slice %260 {offsets = [0, 0], sizes = [2, 128], strides = [1, 1]} : vector<2x256xf32> to vector<2x128xf32>
    %263 = arith.addf %261, %262 : vector<2x128xf32>
    %264 = vector.extract_strided_slice %5 {offsets = [6, 128], sizes = [2, 128], strides = [1, 1]} : vector<16x256xf32> to vector<2x128xf32>
    %265 = vector.extract_strided_slice %260 {offsets = [0, 128], sizes = [2, 128], strides = [1, 1]} : vector<2x256xf32> to vector<2x128xf32>
    %266 = arith.addf %264, %265 : vector<2x128xf32>
    %267 = vector.extract_strided_slice %263 {offsets = [0, 0], sizes = [2, 32], strides = [1, 1]} : vector<2x128xf32> to vector<2x32xf32>
    %268 = arith.negf %267 : vector<2x32xf32>
    %269 = math.exp %268 : vector<2x32xf32>
    %cst_48 = arith.constant 1.000000e+00 : f32
    %270 = vector.broadcast %cst_48 : f32 to vector<2x32xf32>
    %271 = arith.addf %270, %269 : vector<2x32xf32>
    %272 = arith.divf %270, %271 : vector<2x32xf32>
    %273 = vector.extract_strided_slice %263 {offsets = [0, 32], sizes = [2, 32], strides = [1, 1]} : vector<2x128xf32> to vector<2x32xf32>
    %274 = arith.negf %273 : vector<2x32xf32>
    %275 = math.exp %274 : vector<2x32xf32>
    %cst_49 = arith.constant 1.000000e+00 : f32
    %276 = vector.broadcast %cst_49 : f32 to vector<2x32xf32>
    %277 = arith.addf %276, %275 : vector<2x32xf32>
    %278 = arith.divf %276, %277 : vector<2x32xf32>
    %279 = vector.extract_strided_slice %263 {offsets = [0, 64], sizes = [2, 32], strides = [1, 1]} : vector<2x128xf32> to vector<2x32xf32>
    %280 = math.tanh %279 : vector<2x32xf32>
    %281 = vector.extract_strided_slice %263 {offsets = [0, 96], sizes = [2, 32], strides = [1, 1]} : vector<2x128xf32> to vector<2x32xf32>
    %282 = arith.negf %281 : vector<2x32xf32>
    %283 = math.exp %282 : vector<2x32xf32>
    %cst_50 = arith.constant 1.000000e+00 : f32
    %284 = vector.broadcast %cst_50 : f32 to vector<2x32xf32>
    %285 = arith.addf %284, %283 : vector<2x32xf32>
    %286 = arith.divf %284, %285 : vector<2x32xf32>
    %287 = arith.mulf %278, %227 : vector<2x32xf32>
    %288 = arith.mulf %272, %280 : vector<2x32xf32>
    %289 = arith.addf %287, %288 : vector<2x32xf32>
    %290 = math.tanh %289 : vector<2x32xf32>
    %291 = arith.mulf %286, %290 : vector<2x32xf32>
    %292 = vector.extract_strided_slice %266 {offsets = [0, 0], sizes = [2, 32], strides = [1, 1]} : vector<2x128xf32> to vector<2x32xf32>
    %293 = arith.negf %292 : vector<2x32xf32>
    %294 = math.exp %293 : vector<2x32xf32>
    %cst_51 = arith.constant 1.000000e+00 : f32
    %295 = vector.broadcast %cst_51 : f32 to vector<2x32xf32>
    %296 = arith.addf %295, %294 : vector<2x32xf32>
    %297 = arith.divf %295, %296 : vector<2x32xf32>
    %298 = vector.extract_strided_slice %266 {offsets = [0, 32], sizes = [2, 32], strides = [1, 1]} : vector<2x128xf32> to vector<2x32xf32>
    %299 = arith.negf %298 : vector<2x32xf32>
    %300 = math.exp %299 : vector<2x32xf32>
    %cst_52 = arith.constant 1.000000e+00 : f32
    %301 = vector.broadcast %cst_52 : f32 to vector<2x32xf32>
    %302 = arith.addf %301, %300 : vector<2x32xf32>
    %303 = arith.divf %301, %302 : vector<2x32xf32>
    %304 = vector.extract_strided_slice %266 {offsets = [0, 64], sizes = [2, 32], strides = [1, 1]} : vector<2x128xf32> to vector<2x32xf32>
    %305 = math.tanh %304 : vector<2x32xf32>
    %306 = vector.extract_strided_slice %266 {offsets = [0, 96], sizes = [2, 32], strides = [1, 1]} : vector<2x128xf32> to vector<2x32xf32>
    %307 = arith.negf %306 : vector<2x32xf32>
    %308 = math.exp %307 : vector<2x32xf32>
    %cst_53 = arith.constant 1.000000e+00 : f32
    %309 = vector.broadcast %cst_53 : f32 to vector<2x32xf32>
    %310 = arith.addf %309, %308 : vector<2x32xf32>
    %311 = arith.divf %309, %310 : vector<2x32xf32>
    %312 = arith.mulf %303, %252 : vector<2x32xf32>
    %313 = arith.mulf %297, %305 : vector<2x32xf32>
    %314 = arith.addf %312, %313 : vector<2x32xf32>
    %315 = math.tanh %314 : vector<2x32xf32>
    %316 = arith.mulf %311, %315 : vector<2x32xf32>
    %317 = vector.extract_strided_slice %291 {offsets = [1, 0], sizes = [1, 32], strides = [1, 1]} : vector<2x32xf32> to vector<1x32xf32>
    %c4_54 = arith.constant 4 : index
    %c0_55 = arith.constant 0 : index
    %318 = vector.load %arg7[%c4_54, %c0_55] : memref<8x64xf32, #tpu.memory_space<vmem>>, vector<1x32xf32>
    tpu.vector_store %arg7[%c4_54, %c0_55], %317 {strides = array<i32>} : memref<8x64xf32, #tpu.memory_space<vmem>>, vector<1x32xf32>,
    %319 = vector.extract_strided_slice %316 {offsets = [1, 0], sizes = [1, 32], strides = [1, 1]} : vector<2x32xf32> to vector<1x32xf32>
    %c3_56 = arith.constant 3 : index
    %c32_57 = arith.constant 32 : index
    %320 = vector.load %arg7[%c3_56, %c32_57] : memref<8x64xf32, #tpu.memory_space<vmem>>, vector<1x32xf32>
    tpu.vector_store %arg7[%c3_56, %c32_57], %319 {strides = array<i32>} : memref<8x64xf32, #tpu.memory_space<vmem>>, vector<1x32xf32>,
    %321 = tpu.concatenate %291, %316 in 1 : vector<2x32xf32>, vector<2x32xf32> -> vector<2x64xf32>
    %cst_58 = arith.constant dense<0.000000e+00> : vector<2x256xf32>
    %322 = tpu.matmul %321, %6, %cst_58 {dimension_numbers = #tpu.dot_dimension_numbers<[1], [0], [0], [1], [0, 0, 1, 1], [], []>} : vector<2x64xf32>, vector<64x256xf32>, vector<2x256xf32> -> vector<2x256xf32>
    %323 = vector.extract_strided_slice %5 {offsets = [10, 0], sizes = [2, 128], strides = [1, 1]} : vector<16x256xf32> to vector<2x128xf32>
    %324 = vector.extract_strided_slice %322 {offsets = [0, 0], sizes = [2, 128], strides = [1, 1]} : vector<2x256xf32> to vector<2x128xf32>
    %325 = arith.addf %323, %324 : vector<2x128xf32>
    %326 = vector.extract_strided_slice %5 {offsets = [4, 128], sizes = [2, 128], strides = [1, 1]} : vector<16x256xf32> to vector<2x128xf32>
    %327 = vector.extract_strided_slice %322 {offsets = [0, 128], sizes = [2, 128], strides = [1, 1]} : vector<2x256xf32> to vector<2x128xf32>
    %328 = arith.addf %326, %327 : vector<2x128xf32>
    %329 = vector.extract_strided_slice %325 {offsets = [0, 0], sizes = [2, 32], strides = [1, 1]} : vector<2x128xf32> to vector<2x32xf32>
    %330 = arith.negf %329 : vector<2x32xf32>
    %331 = math.exp %330 : vector<2x32xf32>
    %cst_59 = arith.constant 1.000000e+00 : f32
    %332 = vector.broadcast %cst_59 : f32 to vector<2x32xf32>
    %333 = arith.addf %332, %331 : vector<2x32xf32>
    %334 = arith.divf %332, %333 : vector<2x32xf32>
    %335 = vector.extract_strided_slice %325 {offsets = [0, 32], sizes = [2, 32], strides = [1, 1]} : vector<2x128xf32> to vector<2x32xf32>
    %336 = arith.negf %335 : vector<2x32xf32>
    %337 = math.exp %336 : vector<2x32xf32>
    %cst_60 = arith.constant 1.000000e+00 : f32
    %338 = vector.broadcast %cst_60 : f32 to vector<2x32xf32>
    %339 = arith.addf %338, %337 : vector<2x32xf32>
    %340 = arith.divf %338, %339 : vector<2x32xf32>
    %341 = vector.extract_strided_slice %325 {offsets = [0, 64], sizes = [2, 32], strides = [1, 1]} : vector<2x128xf32> to vector<2x32xf32>
    %342 = math.tanh %341 : vector<2x32xf32>
    %343 = vector.extract_strided_slice %325 {offsets = [0, 96], sizes = [2, 32], strides = [1, 1]} : vector<2x128xf32> to vector<2x32xf32>
    %344 = arith.negf %343 : vector<2x32xf32>
    %345 = math.exp %344 : vector<2x32xf32>
    %cst_61 = arith.constant 1.000000e+00 : f32
    %346 = vector.broadcast %cst_61 : f32 to vector<2x32xf32>
    %347 = arith.addf %346, %345 : vector<2x32xf32>
    %348 = arith.divf %346, %347 : vector<2x32xf32>
    %349 = arith.mulf %340, %289 : vector<2x32xf32>
    %350 = arith.mulf %334, %342 : vector<2x32xf32>
    %351 = arith.addf %349, %350 : vector<2x32xf32>
    %352 = math.tanh %351 : vector<2x32xf32>
    %353 = arith.mulf %348, %352 : vector<2x32xf32>
    %354 = vector.extract_strided_slice %328 {offsets = [0, 0], sizes = [2, 32], strides = [1, 1]} : vector<2x128xf32> to vector<2x32xf32>
    %355 = arith.negf %354 : vector<2x32xf32>
    %356 = math.exp %355 : vector<2x32xf32>
    %cst_62 = arith.constant 1.000000e+00 : f32
    %357 = vector.broadcast %cst_62 : f32 to vector<2x32xf32>
    %358 = arith.addf %357, %356 : vector<2x32xf32>
    %359 = arith.divf %357, %358 : vector<2x32xf32>
    %360 = vector.extract_strided_slice %328 {offsets = [0, 32], sizes = [2, 32], strides = [1, 1]} : vector<2x128xf32> to vector<2x32xf32>
    %361 = arith.negf %360 : vector<2x32xf32>
    %362 = math.exp %361 : vector<2x32xf32>
    %cst_63 = arith.constant 1.000000e+00 : f32
    %363 = vector.broadcast %cst_63 : f32 to vector<2x32xf32>
    %364 = arith.addf %363, %362 : vector<2x32xf32>
    %365 = arith.divf %363, %364 : vector<2x32xf32>
    %366 = vector.extract_strided_slice %328 {offsets = [0, 64], sizes = [2, 32], strides = [1, 1]} : vector<2x128xf32> to vector<2x32xf32>
    %367 = math.tanh %366 : vector<2x32xf32>
    %368 = vector.extract_strided_slice %328 {offsets = [0, 96], sizes = [2, 32], strides = [1, 1]} : vector<2x128xf32> to vector<2x32xf32>
    %369 = arith.negf %368 : vector<2x32xf32>
    %370 = math.exp %369 : vector<2x32xf32>
    %cst_64 = arith.constant 1.000000e+00 : f32
    %371 = vector.broadcast %cst_64 : f32 to vector<2x32xf32>
    %372 = arith.addf %371, %370 : vector<2x32xf32>
    %373 = arith.divf %371, %372 : vector<2x32xf32>
    %374 = arith.mulf %365, %314 : vector<2x32xf32>
    %375 = arith.mulf %359, %367 : vector<2x32xf32>
    %376 = arith.addf %374, %375 : vector<2x32xf32>
    %377 = math.tanh %376 : vector<2x32xf32>
    %378 = arith.mulf %373, %377 : vector<2x32xf32>
    %379 = vector.extract_strided_slice %353 {offsets = [1, 0], sizes = [1, 32], strides = [1, 1]} : vector<2x32xf32> to vector<1x32xf32>
    %c5_65 = arith.constant 5 : index
    %c0_66 = arith.constant 0 : index
    %380 = vector.load %arg7[%c5_65, %c0_66] : memref<8x64xf32, #tpu.memory_space<vmem>>, vector<1x32xf32>
    tpu.vector_store %arg7[%c5_65, %c0_66], %379 {strides = array<i32>} : memref<8x64xf32, #tpu.memory_space<vmem>>, vector<1x32xf32>,
    %381 = vector.extract_strided_slice %378 {offsets = [1, 0], sizes = [1, 32], strides = [1, 1]} : vector<2x32xf32> to vector<1x32xf32>
    %c2_67 = arith.constant 2 : index
    %c32_68 = arith.constant 32 : index
    %382 = vector.load %arg7[%c2_67, %c32_68] : memref<8x64xf32, #tpu.memory_space<vmem>>, vector<1x32xf32>
    tpu.vector_store %arg7[%c2_67, %c32_68], %381 {strides = array<i32>} : memref<8x64xf32, #tpu.memory_space<vmem>>, vector<1x32xf32>,
    %383 = tpu.concatenate %353, %378 in 1 : vector<2x32xf32>, vector<2x32xf32> -> vector<2x64xf32>
    %cst_69 = arith.constant dense<0.000000e+00> : vector<2x256xf32>
    %384 = tpu.matmul %383, %6, %cst_69 {dimension_numbers = #tpu.dot_dimension_numbers<[1], [0], [0], [1], [0, 0, 1, 1], [], []>} : vector<2x64xf32>, vector<64x256xf32>, vector<2x256xf32> -> vector<2x256xf32>
    %385 = vector.extract_strided_slice %5 {offsets = [12, 0], sizes = [2, 128], strides = [1, 1]} : vector<16x256xf32> to vector<2x128xf32>
    %386 = vector.extract_strided_slice %384 {offsets = [0, 0], sizes = [2, 128], strides = [1, 1]} : vector<2x256xf32> to vector<2x128xf32>
    %387 = arith.addf %385, %386 : vector<2x128xf32>
    %388 = vector.extract_strided_slice %5 {offsets = [2, 128], sizes = [2, 128], strides = [1, 1]} : vector<16x256xf32> to vector<2x128xf32>
    %389 = vector.extract_strided_slice %384 {offsets = [0, 128], sizes = [2, 128], strides = [1, 1]} : vector<2x256xf32> to vector<2x128xf32>
    %390 = arith.addf %388, %389 : vector<2x128xf32>
    %391 = vector.extract_strided_slice %387 {offsets = [0, 0], sizes = [2, 32], strides = [1, 1]} : vector<2x128xf32> to vector<2x32xf32>
    %392 = arith.negf %391 : vector<2x32xf32>
    %393 = math.exp %392 : vector<2x32xf32>
    %cst_70 = arith.constant 1.000000e+00 : f32
    %394 = vector.broadcast %cst_70 : f32 to vector<2x32xf32>
    %395 = arith.addf %394, %393 : vector<2x32xf32>
    %396 = arith.divf %394, %395 : vector<2x32xf32>
    %397 = vector.extract_strided_slice %387 {offsets = [0, 32], sizes = [2, 32], strides = [1, 1]} : vector<2x128xf32> to vector<2x32xf32>
    %398 = arith.negf %397 : vector<2x32xf32>
    %399 = math.exp %398 : vector<2x32xf32>
    %cst_71 = arith.constant 1.000000e+00 : f32
    %400 = vector.broadcast %cst_71 : f32 to vector<2x32xf32>
    %401 = arith.addf %400, %399 : vector<2x32xf32>
    %402 = arith.divf %400, %401 : vector<2x32xf32>
    %403 = vector.extract_strided_slice %387 {offsets = [0, 64], sizes = [2, 32], strides = [1, 1]} : vector<2x128xf32> to vector<2x32xf32>
    %404 = math.tanh %403 : vector<2x32xf32>
    %405 = vector.extract_strided_slice %387 {offsets = [0, 96], sizes = [2, 32], strides = [1, 1]} : vector<2x128xf32> to vector<2x32xf32>
    %406 = arith.negf %405 : vector<2x32xf32>
    %407 = math.exp %406 : vector<2x32xf32>
    %cst_72 = arith.constant 1.000000e+00 : f32
    %408 = vector.broadcast %cst_72 : f32 to vector<2x32xf32>
    %409 = arith.addf %408, %407 : vector<2x32xf32>
    %410 = arith.divf %408, %409 : vector<2x32xf32>
    %411 = arith.mulf %402, %351 : vector<2x32xf32>
    %412 = arith.mulf %396, %404 : vector<2x32xf32>
    %413 = arith.addf %411, %412 : vector<2x32xf32>
    %414 = math.tanh %413 : vector<2x32xf32>
    %415 = arith.mulf %410, %414 : vector<2x32xf32>
    %416 = vector.extract_strided_slice %390 {offsets = [0, 0], sizes = [2, 32], strides = [1, 1]} : vector<2x128xf32> to vector<2x32xf32>
    %417 = arith.negf %416 : vector<2x32xf32>
    %418 = math.exp %417 : vector<2x32xf32>
    %cst_73 = arith.constant 1.000000e+00 : f32
    %419 = vector.broadcast %cst_73 : f32 to vector<2x32xf32>
    %420 = arith.addf %419, %418 : vector<2x32xf32>
    %421 = arith.divf %419, %420 : vector<2x32xf32>
    %422 = vector.extract_strided_slice %390 {offsets = [0, 32], sizes = [2, 32], strides = [1, 1]} : vector<2x128xf32> to vector<2x32xf32>
    %423 = arith.negf %422 : vector<2x32xf32>
    %424 = math.exp %423 : vector<2x32xf32>
    %cst_74 = arith.constant 1.000000e+00 : f32
    %425 = vector.broadcast %cst_74 : f32 to vector<2x32xf32>
    %426 = arith.addf %425, %424 : vector<2x32xf32>
    %427 = arith.divf %425, %426 : vector<2x32xf32>
    %428 = vector.extract_strided_slice %390 {offsets = [0, 64], sizes = [2, 32], strides = [1, 1]} : vector<2x128xf32> to vector<2x32xf32>
    %429 = math.tanh %428 : vector<2x32xf32>
    %430 = vector.extract_strided_slice %390 {offsets = [0, 96], sizes = [2, 32], strides = [1, 1]} : vector<2x128xf32> to vector<2x32xf32>
    %431 = arith.negf %430 : vector<2x32xf32>
    %432 = math.exp %431 : vector<2x32xf32>
    %cst_75 = arith.constant 1.000000e+00 : f32
    %433 = vector.broadcast %cst_75 : f32 to vector<2x32xf32>
    %434 = arith.addf %433, %432 : vector<2x32xf32>
    %435 = arith.divf %433, %434 : vector<2x32xf32>
    %436 = arith.mulf %427, %376 : vector<2x32xf32>
    %437 = arith.mulf %421, %429 : vector<2x32xf32>
    %438 = arith.addf %436, %437 : vector<2x32xf32>
    %439 = math.tanh %438 : vector<2x32xf32>
    %440 = arith.mulf %435, %439 : vector<2x32xf32>
    %441 = vector.extract_strided_slice %415 {offsets = [1, 0], sizes = [1, 32], strides = [1, 1]} : vector<2x32xf32> to vector<1x32xf32>
    %c6_76 = arith.constant 6 : index
    %c0_77 = arith.constant 0 : index
    %442 = vector.load %arg7[%c6_76, %c0_77] : memref<8x64xf32, #tpu.memory_space<vmem>>, vector<1x32xf32>
    tpu.vector_store %arg7[%c6_76, %c0_77], %441 {strides = array<i32>} : memref<8x64xf32, #tpu.memory_space<vmem>>, vector<1x32xf32>,
    %443 = vector.extract_strided_slice %440 {offsets = [1, 0], sizes = [1, 32], strides = [1, 1]} : vector<2x32xf32> to vector<1x32xf32>
    %c1_78 = arith.constant 1 : index
    %c32_79 = arith.constant 32 : index
    %444 = vector.load %arg7[%c1_78, %c32_79] : memref<8x64xf32, #tpu.memory_space<vmem>>, vector<1x32xf32>
    tpu.vector_store %arg7[%c1_78, %c32_79], %443 {strides = array<i32>} : memref<8x64xf32, #tpu.memory_space<vmem>>, vector<1x32xf32>,
    %445 = tpu.concatenate %415, %440 in 1 : vector<2x32xf32>, vector<2x32xf32> -> vector<2x64xf32>
    %cst_80 = arith.constant dense<0.000000e+00> : vector<2x256xf32>
    %446 = tpu.matmul %445, %6, %cst_80 {dimension_numbers = #tpu.dot_dimension_numbers<[1], [0], [0], [1], [0, 0, 1, 1], [], []>} : vector<2x64xf32>, vector<64x256xf32>, vector<2x256xf32> -> vector<2x256xf32>
    %447 = vector.extract_strided_slice %5 {offsets = [14, 0], sizes = [2, 128], strides = [1, 1]} : vector<16x256xf32> to vector<2x128xf32>
    %448 = vector.extract_strided_slice %446 {offsets = [0, 0], sizes = [2, 128], strides = [1, 1]} : vector<2x256xf32> to vector<2x128xf32>
    %449 = arith.addf %447, %448 : vector<2x128xf32>
    %450 = vector.extract_strided_slice %5 {offsets = [0, 128], sizes = [2, 128], strides = [1, 1]} : vector<16x256xf32> to vector<2x128xf32>
    %451 = vector.extract_strided_slice %446 {offsets = [0, 128], sizes = [2, 128], strides = [1, 1]} : vector<2x256xf32> to vector<2x128xf32>
    %452 = arith.addf %450, %451 : vector<2x128xf32>
    %453 = vector.extract_strided_slice %449 {offsets = [0, 0], sizes = [2, 32], strides = [1, 1]} : vector<2x128xf32> to vector<2x32xf32>
    %454 = arith.negf %453 : vector<2x32xf32>
    %455 = math.exp %454 : vector<2x32xf32>
    %cst_81 = arith.constant 1.000000e+00 : f32
    %456 = vector.broadcast %cst_81 : f32 to vector<2x32xf32>
    %457 = arith.addf %456, %455 : vector<2x32xf32>
    %458 = arith.divf %456, %457 : vector<2x32xf32>
    %459 = vector.extract_strided_slice %449 {offsets = [0, 32], sizes = [2, 32], strides = [1, 1]} : vector<2x128xf32> to vector<2x32xf32>
    %460 = arith.negf %459 : vector<2x32xf32>
    %461 = math.exp %460 : vector<2x32xf32>
    %cst_82 = arith.constant 1.000000e+00 : f32
    %462 = vector.broadcast %cst_82 : f32 to vector<2x32xf32>
    %463 = arith.addf %462, %461 : vector<2x32xf32>
    %464 = arith.divf %462, %463 : vector<2x32xf32>
    %465 = vector.extract_strided_slice %449 {offsets = [0, 64], sizes = [2, 32], strides = [1, 1]} : vector<2x128xf32> to vector<2x32xf32>
    %466 = math.tanh %465 : vector<2x32xf32>
    %467 = vector.extract_strided_slice %449 {offsets = [0, 96], sizes = [2, 32], strides = [1, 1]} : vector<2x128xf32> to vector<2x32xf32>
    %468 = arith.negf %467 : vector<2x32xf32>
    %469 = math.exp %468 : vector<2x32xf32>
    %cst_83 = arith.constant 1.000000e+00 : f32
    %470 = vector.broadcast %cst_83 : f32 to vector<2x32xf32>
    %471 = arith.addf %470, %469 : vector<2x32xf32>
    %472 = arith.divf %470, %471 : vector<2x32xf32>
    %473 = arith.mulf %464, %413 : vector<2x32xf32>
    %474 = arith.mulf %458, %466 : vector<2x32xf32>
    %475 = arith.addf %473, %474 : vector<2x32xf32>
    %476 = math.tanh %475 : vector<2x32xf32>
    %477 = arith.mulf %472, %476 : vector<2x32xf32>
    %478 = vector.extract_strided_slice %452 {offsets = [0, 0], sizes = [2, 32], strides = [1, 1]} : vector<2x128xf32> to vector<2x32xf32>
    %479 = arith.negf %478 : vector<2x32xf32>
    %480 = math.exp %479 : vector<2x32xf32>
    %cst_84 = arith.constant 1.000000e+00 : f32
    %481 = vector.broadcast %cst_84 : f32 to vector<2x32xf32>
    %482 = arith.addf %481, %480 : vector<2x32xf32>
    %483 = arith.divf %481, %482 : vector<2x32xf32>
    %484 = vector.extract_strided_slice %452 {offsets = [0, 32], sizes = [2, 32], strides = [1, 1]} : vector<2x128xf32> to vector<2x32xf32>
    %485 = arith.negf %484 : vector<2x32xf32>
    %486 = math.exp %485 : vector<2x32xf32>
    %cst_85 = arith.constant 1.000000e+00 : f32
    %487 = vector.broadcast %cst_85 : f32 to vector<2x32xf32>
    %488 = arith.addf %487, %486 : vector<2x32xf32>
    %489 = arith.divf %487, %488 : vector<2x32xf32>
    %490 = vector.extract_strided_slice %452 {offsets = [0, 64], sizes = [2, 32], strides = [1, 1]} : vector<2x128xf32> to vector<2x32xf32>
    %491 = math.tanh %490 : vector<2x32xf32>
    %492 = vector.extract_strided_slice %452 {offsets = [0, 96], sizes = [2, 32], strides = [1, 1]} : vector<2x128xf32> to vector<2x32xf32>
    %493 = arith.negf %492 : vector<2x32xf32>
    %494 = math.exp %493 : vector<2x32xf32>
    %cst_86 = arith.constant 1.000000e+00 : f32
    %495 = vector.broadcast %cst_86 : f32 to vector<2x32xf32>
    %496 = arith.addf %495, %494 : vector<2x32xf32>
    %497 = arith.divf %495, %496 : vector<2x32xf32>
    %498 = arith.mulf %489, %438 : vector<2x32xf32>
    %499 = arith.mulf %483, %491 : vector<2x32xf32>
    %500 = arith.addf %498, %499 : vector<2x32xf32>
    %501 = math.tanh %500 : vector<2x32xf32>
    %502 = arith.mulf %497, %501 : vector<2x32xf32>
    %503 = vector.extract_strided_slice %477 {offsets = [1, 0], sizes = [1, 32], strides = [1, 1]} : vector<2x32xf32> to vector<1x32xf32>
    %c7_87 = arith.constant 7 : index
    %c0_88 = arith.constant 0 : index
    %504 = vector.load %arg7[%c7_87, %c0_88] : memref<8x64xf32, #tpu.memory_space<vmem>>, vector<1x32xf32>
    tpu.vector_store %arg7[%c7_87, %c0_88], %503 {strides = array<i32>} : memref<8x64xf32, #tpu.memory_space<vmem>>, vector<1x32xf32>,
    %505 = vector.extract_strided_slice %502 {offsets = [1, 0], sizes = [1, 32], strides = [1, 1]} : vector<2x32xf32> to vector<1x32xf32>
    %c0_89 = arith.constant 0 : index
    %c32_90 = arith.constant 32 : index
    %506 = vector.load %arg7[%c0_89, %c32_90] : memref<8x64xf32, #tpu.memory_space<vmem>>, vector<1x32xf32>
    tpu.vector_store %arg7[%c0_89, %c32_90], %505 {strides = array<i32>} : memref<8x64xf32, #tpu.memory_space<vmem>>, vector<1x32xf32>,
    %c0_91 = arith.constant 0 : index
    %c0_92 = arith.constant 0 : index
    %507 = vector.load %arg7[%c0_91, %c0_92] : memref<8x64xf32, #tpu.memory_space<vmem>>, vector<8x64xf32>
    %c0_93 = arith.constant 0 : index
    %c0_94 = arith.constant 0 : index
    %508 = vector.load %arg4[%c0_93, %c0_94] : memref<1x64xf32, #tpu.memory_space<vmem>>, vector<1x64xf32>
    %509 = vector.broadcast %508 : vector<1x64xf32> to vector<8x64xf32>
    %510 = arith.mulf %507, %509 : vector<8x64xf32>
    %cst_95 = arith.constant dense<0.000000e+00> : vector<8xf32>
    %511 = vector.multi_reduction <add>, %510, %cst_95 [1] : vector<8x64xf32> to vector<8xf32>
    %512 = vector.shape_cast %511 : vector<8xf32> to vector<8x1xf32>
    %c0_96 = arith.constant 0 : index
    %c0_97 = arith.constant 0 : index
    %513 = vector.load %arg5[%c0_96, %c0_97] : memref<1x1xf32, #tpu.memory_space<vmem>>, vector<1x1xf32>
    %514 = vector.broadcast %513 : vector<1x1xf32> to vector<8x1xf32>
    %515 = arith.addf %512, %514 : vector<8x1xf32>
    %c0_98 = arith.constant 0 : index
    %c0_99 = arith.constant 0 : index
    %516 = vector.load %arg6[%c0_98, %c0_99] : memref<8x1xf32, #tpu.memory_space<vmem>>, vector<8x1xf32>
    tpu.vector_store %arg6[%c0_98, %c0_99], %515 {strides = array<i32>} : memref<8x1xf32, #tpu.memory_space<vmem>>, vector<8x1xf32>,
    return
  }
}

</mosaic_0001>

<llo_original>
// kernel: tpu_custom_call.1
$region0: #{tpu_custom_call.1}
  #allocation0 [shape = 'u32[]', space=smem, size = 0x4, offset = 0x4, fixed_abs, tag = 'smem constant byte address 0x4 - core index']
  #allocation1 [shape = 'u32[144,128]{1,0:T(1,128)}', space=vmem, size = 0x12000, scoped, tag = 'internal scratch']
  #allocation2 [shape = 'f32[8,64]{1,0:T(8,128)}', space=vmem, size = 0x1000, scoped, tag = 'scratch operand']
  #allocation3 [shape = 'f32[1,1]{1,0:T(1,128)S(1)}', space=vmem, size = 0x200, scoped, tag = 'scoped memory for tpu_custom_call.1']
  %s0 = inlined_call_operand.hbm [shape: f32[16,16], index: 0, kind: input, shape index: {}]
  %s1 = inlined_call_operand.hbm [shape: f32[16,256], index: 1, kind: input, shape index: {}]
  %s2 = inlined_call_operand.hbm [shape: f32[64,256], index: 2, kind: input, shape index: {}]
  %s3 = inlined_call_operand.vmem [shape: f32[1,256], index: 3, kind: input, shape index: {}]
  %s4 = inlined_call_operand.vmem [shape: f32[1,64], index: 4, kind: input, shape index: {}]
  %s5 = inlined_call_operand.<no memory space> [shape: f32[1,1], index: 5, kind: input, shape index: {}]
  %s6 = inlined_call_operand.vmem [shape: f32[8,1], index: 6, kind: output, shape index: {}]
  %s7 = sld [smem:[#allocation0]]
  $region46: #{tpu_custom_call.1} parent=0
    _
  %s9 = ssub.s32 1, %s7
  %s10 = scalar_select 0, %s9, %s7
  %v11 = vstv %s5
  %12 = vst [vmem:[#allocation3] sm:$0x1] %v11
  $region1: #{tpu_custom_call.1} parent=0
    #allocation4 [shape = 'u8[8192]{0}', space=vmem, size = 0x2000, scoped, tag = 'input window, operand 0, single buffered']
    #allocation5 [shape = 's32[1]{0}', space=sflag, size = 0x4, scoped, tag = 'scoped memory for tpu_custom_call.1']
    #allocation6 [shape = 'u8[16384]{0}', space=vmem, size = 0x4000, scoped, tag = 'input window, operand 1, single buffered']
    #allocation7 [shape = 's32[1]{0}', space=sflag, size = 0x4, scoped, tag = 'scoped memory for tpu_custom_call.1']
    #allocation8 [shape = 'u8[65536]{0}', space=vmem, size = 0x10000, scoped, tag = 'input window, operand 2, single buffered']
    %13 = vsyncpa [#allocation5], 0
    %14 = vsyncpa [#allocation7], 0
    // Predicated region
    $region2: #{tpu_custom_call.1} parent=1 // pred_check
      _
    $region3: #{tpu_custom_call.1} parent=1 // pred_check_branch
      %16 = sbr.rel (0) target = $region5
    $region4: #{tpu_custom_call.1} parent=1 // pred_region
      %s18 = ssub.s32 256, 256
      %19 = vsyncadd [#allocation5], %s18
      %s20 = sshll.u32 [#allocation4], 4
      %s21 = int_to_ptr.vmem [resolvable:$true] %s20
      %26 = dma.hbm_to_vmem [thread:$0]  %s0, 256, %s21, [#allocation5], 128, 128, 8
    $region5: #{tpu_custom_call.1} parent=1 // pred_fallthru
      _
    // Predicated region
    $region6: #{tpu_custom_call.1} parent=1 // pred_check
      _
    $region7: #{tpu_custom_call.1} parent=1 // pred_check_branch
      %28 = sbr.rel (0) target = $region9
    $region8: #{tpu_custom_call.1} parent=1 // pred_region
      %s30 = ssub.s32 512, 512
      %31 = vsyncadd [#allocation7], %s30
      %s32 = sshll.u32 [#allocation6], 4
      %s33 = int_to_ptr.vmem [resolvable:$true] %s32
      %38 = dma.hbm_to_vmem [thread:$0]  %s1, 512, %s33, [#allocation7], 256, 256, 16
    $region9: #{tpu_custom_call.1} parent=1 // pred_fallthru
      _
    // Predicated region
    $region10: #{tpu_custom_call.1} parent=1 // pred_check
      _
    $region11: #{tpu_custom_call.1} parent=1 // pred_check_branch
      %40 = sbr.rel (0) target = $region13
    $region12: #{tpu_custom_call.1} parent=1 // pred_region
      %s42 = ssub.s32 2048, 2048
      %43 = vsyncadd [#allocation7], %s42
      %s44 = sshll.u32 [#allocation8], 4
      %s45 = int_to_ptr.vmem [resolvable:$true] %s44
      %50 = dma.hbm_to_vmem [thread:$0]  %s2, 2048, %s45, [#allocation7], 256, 256, 16
    $region13: #{tpu_custom_call.1} parent=1 // pred_fallthru
      _
    // Predicated region
    $region14: #{tpu_custom_call.1} parent=1 // pred_check
      _
    $region15: #{tpu_custom_call.1} parent=1 // pred_check_branch
      %52 = sbr.rel (0) target = $region17
    $region16: #{tpu_custom_call.1} parent=1 // pred_region
      _
    $region17: #{tpu_custom_call.1} parent=1 // pred_fallthru
      _
    // Predicated region
    $region18: #{tpu_custom_call.1} parent=1 // pred_check
      _
    $region19: #{tpu_custom_call.1} parent=1 // pred_check_branch
      %54 = sbr.rel (0) target = $region21
    $region20: #{tpu_custom_call.1} parent=1 // pred_region
      _
    $region21: #{tpu_custom_call.1} parent=1 // pred_fallthru
      _
    // Predicated region
    $region22: #{tpu_custom_call.1} parent=1 // pred_check
      _
    $region23: #{tpu_custom_call.1} parent=1 // pred_check_branch
      %56 = sbr.rel (0) target = $region25
    $region24: #{tpu_custom_call.1} parent=1 // pred_region
      _
    $region25: #{tpu_custom_call.1} parent=1 // pred_fallthru
      _
    // Predicated region
    $region26: #{tpu_custom_call.1} parent=1 // pred_check
      _
    $region27: #{tpu_custom_call.1} parent=1 // pred_check_branch
      %58 = sbr.rel (0) target = $region29
    $region28: #{tpu_custom_call.1} parent=1 // pred_region
      %59 = dma.done [#allocation5], 256
    $region29: #{tpu_custom_call.1} parent=1 // pred_fallthru
      _
    // Predicated region
    $region30: #{tpu_custom_call.1} parent=1 // pred_check
      _
    $region31: #{tpu_custom_call.1} parent=1 // pred_check_branch
      %61 = sbr.rel (0) target = $region33
    $region32: #{tpu_custom_call.1} parent=1 // pred_region
      %62 = dma.done [#allocation7], 512
    $region33: #{tpu_custom_call.1} parent=1 // pred_fallthru
      _
    // Predicated region
    $region34: #{tpu_custom_call.1} parent=1 // pred_check
      _
    $region35: #{tpu_custom_call.1} parent=1 // pred_check_branch
      %64 = sbr.rel (0) target = $region37
    $region36: #{tpu_custom_call.1} parent=1 // pred_region
      %65 = dma.done [#allocation7], 2048
    $region37: #{tpu_custom_call.1} parent=1 // pred_fallthru
      _
    %v66 = vld [vmem:[#allocation4] sm:$0xff]
    %v67 = vld [vmem:[#allocation4 + $0x8] sm:$0xff]
    %v68 = vld [vmem:[#allocation6] sm:$0xff]
    %v69 = vld [vmem:[#allocation6 + $0x8] sm:$0xff]
    %v70 = vld [vmem:[#allocation6 + $0x10] sm:$0xff]
    %v71 = vld [vmem:[#allocation6 + $0x18] sm:$0xff]
    %v72 = vld [vmem:[%s3] sm:$0x3]
    %v74 = vlaneseq
    %v75 = vshrl.u32 %v74, 7
    %v76 = vsub.s32 0, %v75
    %v77 = vrot.slane %v72, %v76
    %v78 = vlaneseq
    %v79 = vshrl.u32 %v78, 7
    %v80 = vsub.s32 1, %v79
    %v81 = vrot.slane %v72, %v80
    %vm84 = vcmask 130048
    %v86 = vsel %vm84, %v66, 0
    %v89 = vsel %vm84, %v67, 0
    %91 = vmatprep.subr.mxu0 %v69
    %92 = vmatpush1.msra.mxu0 %v68
    %93 = vmatprep.subr.mxu0 %v71
    %94 = vmatpush1.msra.mxu0 %v70
    %95 = vmatprep.subr.mxu0 0.0
    %96 = vmatpush1.msra.mxu0 0.0
    %97 = vmatprep.subr.mxu0 0.0
    %98 = vmatpush1.msra.mxu0 0.0
    %99 = vmatprep.subr.mxu0 0.0
    %100 = vmatpush1.msra.mxu0 0.0
    %101 = vmatprep.subr.mxu0 0.0
    %102 = vmatpush1.msra.mxu0 0.0
    %103 = vmatprep.subr.mxu0 0.0
    %104 = vmatpush1.msra.mxu0 0.0
    %105 = vmatprep.subr.mxu0 0.0
    %106 = vmatpush1.msra.mxu0 0.0
    %107 = vmatprep.subr.mxu0 0.0
    %108 = vmatpush1.msra.mxu0 0.0
    %109 = vmatprep.subr.mxu0 0.0
    %110 = vmatpush1.msra.mxu0 0.0
    %111 = vmatprep.subr.mxu0 0.0
    %112 = vmatpush1.msra.mxu0 0.0
    %113 = vmatprep.subr.mxu0 0.0
    %114 = vmatpush1.msra.mxu0 0.0
    %115 = vmatprep.subr.mxu0 0.0
    %116 = vmatpush1.msra.mxu0 0.0
    %117 = vmatprep.subr.mxu0 0.0
    %118 = vmatpush1.msra.mxu0 0.0
    %119 = vmatprep.subr.mxu0 0.0
    %120 = vmatpush1.msra.mxu0 0.0
    %121 = vmatprep.subr.mxu0 0.0
    %122 = vmatpush1.msra.mxu0 0.0
    %123 = vmatprep.subr.mxu0 0.0
    %124 = vmatpush1.msra.mxu0 0.0
    %125 = vmatprep.subr.mxu0 0.0
    %126 = vmatpush1.msra.mxu0 0.0
    %127 = vmatprep.subr.mxu0 0.0
    %128 = vmatpush1.msra.mxu0 0.0
    %129 = vmatprep.subr.mxu0 0.0
    %130 = vmatpush1.msra.mxu0 0.0
    %131 = vmatprep.subr.mxu0 0.0
    %132 = vmatpush1.msra.mxu0 0.0
    %133 = vmatprep.subr.mxu0 0.0
    %134 = vmatpush1.msra.mxu0 0.0
    %135 = vmatprep.subr.mxu0 0.0
    %136 = vmatpush1.msra.mxu0 0.0
    %137 = vmatprep.subr.mxu0 0.0
    %138 = vmatpush1.msra.mxu0 0.0
    %139 = vmatprep.subr.mxu0 0.0
    %140 = vmatpush1.msra.mxu0 0.0
    %141 = vmatprep.subr.mxu0 0.0
    %142 = vmatpush1.msra.mxu0 0.0
    %143 = vmatprep.subr.mxu0 0.0
    %144 = vmatpush1.msra.mxu0 0.0
    %145 = vmatprep.subr.mxu0 0.0
    %146 = vmatpush1.msra.mxu0 0.0
    %147 = vmatprep.subr.mxu0 0.0
    %148 = vmatpush1.msra.mxu0 0.0
    %149 = vmatprep.subr.mxu0 0.0
    %150 = vmatpush1.msra.mxu0 0.0
    %151 = vmatprep.subr.mxu0 0.0
    %152 = vmatpush1.msra.mxu0 0.0
    %153 = vmatprep.subr.mxu0 0.0
    %154 = vmatpush1.msra.mxu0 0.0
    %155 = vmatprep.mubr.f32.mxu0 0.0
    %156 = vmatmul.mubr.f32.gmra.mrb[0].mxu0 %v86
    %v157 = vpop.f32.mrb[0].mxu0
    %v158 = vadd.f32 %v77, %v157
    %v159 = vpop.f32.mrb[0].mxu0
    %v160 = vadd.f32 %v81, %v159
    %161 = vmatprep.mubr.f32.mxu0 0.0
    %162 = vmatmul.mubr.f32.gmra.mrb[0].mxu0 %v89
    %v163 = vpop.f32.mrb[0].mxu0
    %v164 = vadd.f32 %v77, %v163
    %v165 = vpop.f32.mrb[0].mxu0
    %v166 = vadd.f32 %v81, %v165
    %167 = vdwg.mxu0
    %v168 = vld [vmem:[#allocation8] sm:$0xff]
    %v169 = vld [vmem:[#allocation8 + $0x8] sm:$0xff]
    %v170 = vld [vmem:[#allocation8 + $0x10] sm:$0xff]
    %v171 = vld [vmem:[#allocation8 + $0x18] sm:$0xff]
    %v172 = vld [vmem:[#allocation8 + $0x20] sm:$0xff]
    %v173 = vld [vmem:[#allocation8 + $0x28] sm:$0xff]
    %v174 = vld [vmem:[#allocation8 + $0x30] sm:$0xff]
    %v175 = vld [vmem:[#allocation8 + $0x38] sm:$0xff]
    %v176 = vld [vmem:[#allocation8 + $0x40] sm:$0xff]
    %v177 = vld [vmem:[#allocation8 + $0x48] sm:$0xff]
    %v178 = vld [vmem:[#allocation8 + $0x50] sm:$0xff]
    %v179 = vld [vmem:[#allocation8 + $0x58] sm:$0xff]
    %v180 = vld [vmem:[#allocation8 + $0x60] sm:$0xff]
    %v181 = vld [vmem:[#allocation8 + $0x68] sm:$0xff]
    %v182 = vld [vmem:[#allocation8 + $0x70] sm:$0xff]
    %v183 = vld [vmem:[#allocation8 + $0x78] sm:$0xff]
    %vm184 = vcmask 523264
    %v186 = vsel %vm184, 0.0, 0
    %188 = vmatprep.subr.mxu0 %v169
    %189 = vmatpush1.msra.mxu0 %v168
    %190 = vmatprep.subr.mxu0 %v171
    %191 = vmatpush1.msra.mxu0 %v170
    %192 = vmatprep.subr.mxu0 %v173
    %193 = vmatpush1.msra.mxu0 %v172
    %194 = vmatprep.subr.mxu0 %v175
    %195 = vmatpush1.msra.mxu0 %v174
    %196 = vmatprep.subr.mxu0 %v177
    %197 = vmatpush1.msra.mxu0 %v176
    %198 = vmatprep.subr.mxu0 %v179
    %199 = vmatpush1.msra.mxu0 %v178
    %200 = vmatprep.subr.mxu0 %v181
    %201 = vmatpush1.msra.mxu0 %v180
    %202 = vmatprep.subr.mxu0 %v183
    %203 = vmatpush1.msra.mxu0 %v182
    %204 = vmatprep.subr.mxu0 0.0
    %205 = vmatpush1.msra.mxu0 0.0
    %206 = vmatprep.subr.mxu0 0.0
    %207 = vmatpush1.msra.mxu0 0.0
    %208 = vmatprep.subr.mxu0 0.0
    %209 = vmatpush1.msra.mxu0 0.0
    %210 = vmatprep.subr.mxu0 0.0
    %211 = vmatpush1.msra.mxu0 0.0
    %212 = vmatprep.subr.mxu0 0.0
    %213 = vmatpush1.msra.mxu0 0.0
    %214 = vmatprep.subr.mxu0 0.0
    %215 = vmatpush1.msra.mxu0 0.0
    %216 = vmatprep.subr.mxu0 0.0
    %217 = vmatpush1.msra.mxu0 0.0
    %218 = vmatprep.subr.mxu0 0.0
    %219 = vmatpush1.msra.mxu0 0.0
    %220 = vmatprep.subr.mxu0 0.0
    %221 = vmatpush1.msra.mxu0 0.0
    %222 = vmatprep.subr.mxu0 0.0
    %223 = vmatpush1.msra.mxu0 0.0
    %224 = vmatprep.subr.mxu0 0.0
    %225 = vmatpush1.msra.mxu0 0.0
    %226 = vmatprep.subr.mxu0 0.0
    %227 = vmatpush1.msra.mxu0 0.0
    %228 = vmatprep.subr.mxu0 0.0
    %229 = vmatpush1.msra.mxu0 0.0
    %230 = vmatprep.subr.mxu0 0.0
    %231 = vmatpush1.msra.mxu0 0.0
    %232 = vmatprep.subr.mxu0 0.0
    %233 = vmatpush1.msra.mxu0 0.0
    %234 = vmatprep.subr.mxu0 0.0
    %235 = vmatpush1.msra.mxu0 0.0
    %236 = vmatprep.subr.mxu0 0.0
    %237 = vmatpush1.msra.mxu0 0.0
    %238 = vmatprep.subr.mxu0 0.0
    %239 = vmatpush1.msra.mxu0 0.0
    %240 = vmatprep.subr.mxu0 0.0
    %241 = vmatpush1.msra.mxu0 0.0
    %242 = vmatprep.subr.mxu0 0.0
    %243 = vmatpush1.msra.mxu0 0.0
    %244 = vmatprep.subr.mxu0 0.0
    %245 = vmatpush1.msra.mxu0 0.0
    %246 = vmatprep.subr.mxu0 0.0
    %247 = vmatpush1.msra.mxu0 0.0
    %248 = vmatprep.subr.mxu0 0.0
    %249 = vmatpush1.msra.mxu0 0.0
    %250 = vmatprep.subr.mxu0 0.0
    %251 = vmatpush1.msra.mxu0 0.0
    %252 = vmatprep.mubr.f32.mxu0 0.0
    %253 = vmatmul.mubr.f32.gmra.mrb[0].mxu0 %v186
    %v254 = vpop.f32.mrb[0].mxu0
    %v255 = vadd.f32 0.0, %v254
    %v256 = vpop.f32.mrb[0].mxu0
    %v257 = vadd.f32 0.0, %v256
    %258 = vdwg.mxu0
    %v259 = vadd.f32 %v158, %v255
    %v261 = vrot.slane %v257, 2
    %v263 = vadd.f32 %v166, %v261
    %v264 = vxor.u32 %v259, 2147483648
    %v265 = vmul.f32 %v264, 1.442695
    %v266 = vpow.pop %v265
    %v267 = vadd.f32 %v266, 1.0
    %v268 = vrcp.pop %v267
    %v269 = vmul.f32 1.0, %v268
    %v270 = vtanh.pop %v259
    %v271 = vmul.f32 %v269, 0.0
    %273 = vrot.lane.b32.xlu0 %v270, 64
    %v274 = vpop.permute.xlu0 %273
    %v276 = vmul.f32 %v269, %v274
    %278 = vrot.lane.b32.xlu0 %v276, 32
    %v279 = vpop.permute.xlu0 %278
    %v281 = vadd.f32 %v271, %v279
    %v282 = vtanh.pop %v281
    %284 = vrot.lane.b32.xlu0 %v282, 64
    %v285 = vpop.permute.xlu0 %284
    %v287 = vmul.f32 %v269, %v285
    %v288 = vxor.u32 %v263, 2147483648
    %v289 = vmul.f32 %v288, 1.442695
    %v290 = vpow.pop %v289
    %v291 = vadd.f32 %v290, 1.0
    %v292 = vrcp.pop %v291
    %v293 = vmul.f32 1.0, %v292
    %v294 = vtanh.pop %v263
    %v295 = vmul.f32 %v293, 0.0
    %297 = vrot.lane.b32.xlu0 %v294, 64
    %v298 = vpop.permute.xlu0 %297
    %v300 = vmul.f32 %v293, %v298
    %302 = vrot.lane.b32.xlu0 %v300, 32
    %v303 = vpop.permute.xlu0 %302
    %v305 = vadd.f32 %v295, %v303
    %v306 = vtanh.pop %v305
    %308 = vrot.lane.b32.xlu0 %v306, 64
    %v309 = vpop.permute.xlu0 %308
    %v311 = vmul.f32 %v293, %v309
    %313 = vrot.lane.b32.xlu0 %v287, 32
    %v314 = vpop.permute.xlu0 %313
    %vm316 = vcmask 254977
    %317 = vst.msk [vmem:[#allocation2 - $0x1] sm:$0x2] %vm316, %v314
    %319 = vrot.lane.b32.xlu0 %v311, 64
    %v320 = vpop.permute.xlu0 %319
    %vm322 = vcmask 523527
    %323 = vst.msk [vmem:[#allocation2] sm:$0x80] %vm322, %v320
    %v324 = vrot.slane %v311, 6
    %325 = vrot.lane.b32.xlu0 %v324, 64
    %v326 = vpop.permute.xlu0 %325
    %vm328 = vcmask 261120
    %v329 = vsel %vm328, %v314, %v326
    %v331 = vsel %vm184, %v329, 0
    %333 = vmatprep.subr.mxu0 %v169
    %334 = vmatpush1.msra.mxu0 %v168
    %335 = vmatprep.subr.mxu0 %v171
    %336 = vmatpush1.msra.mxu0 %v170
    %337 = vmatprep.subr.mxu0 %v173
    %338 = vmatpush1.msra.mxu0 %v172
    %339 = vmatprep.subr.mxu0 %v175
    %340 = vmatpush1.msra.mxu0 %v174
    %341 = vmatprep.subr.mxu0 %v177
    %342 = vmatpush1.msra.mxu0 %v176
    %343 = vmatprep.subr.mxu0 %v179
    %344 = vmatpush1.msra.mxu0 %v178
    %345 = vmatprep.subr.mxu0 %v181
    %346 = vmatpush1.msra.mxu0 %v180
    %347 = vmatprep.subr.mxu0 %v183
    %348 = vmatpush1.msra.mxu0 %v182
    %349 = vmatprep.subr.mxu0 0.0
    %350 = vmatpush1.msra.mxu0 0.0
    %351 = vmatprep.subr.mxu0 0.0
    %352 = vmatpush1.msra.mxu0 0.0
    %353 = vmatprep.subr.mxu0 0.0
    %354 = vmatpush1.msra.mxu0 0.0
    %355 = vmatprep.subr.mxu0 0.0
    %356 = vmatpush1.msra.mxu0 0.0
    %357 = vmatprep.subr.mxu0 0.0
    %358 = vmatpush1.msra.mxu0 0.0
    %359 = vmatprep.subr.mxu0 0.0
    %360 = vmatpush1.msra.mxu0 0.0
    %361 = vmatprep.subr.mxu0 0.0
    %362 = vmatpush1.msra.mxu0 0.0
    %363 = vmatprep.subr.mxu0 0.0
    %364 = vmatpush1.msra.mxu0 0.0
    %365 = vmatprep.subr.mxu0 0.0
    %366 = vmatpush1.msra.mxu0 0.0
    %367 = vmatprep.subr.mxu0 0.0
    %368 = vmatpush1.msra.mxu0 0.0
    %369 = vmatprep.subr.mxu0 0.0
    %370 = vmatpush1.msra.mxu0 0.0
    %371 = vmatprep.subr.mxu0 0.0
    %372 = vmatpush1.msra.mxu0 0.0
    %373 = vmatprep.subr.mxu0 0.0
    %374 = vmatpush1.msra.mxu0 0.0
    %375 = vmatprep.subr.mxu0 0.0
    %376 = vmatpush1.msra.mxu0 0.0
    %377 = vmatprep.subr.mxu0 0.0
    %378 = vmatpush1.msra.mxu0 0.0
    %379 = vmatprep.subr.mxu0 0.0
    %380 = vmatpush1.msra.mxu0 0.0
    %381 = vmatprep.subr.mxu0 0.0
    %382 = vmatpush1.msra.mxu0 0.0
    %383 = vmatprep.subr.mxu0 0.0
    %384 = vmatpush1.msra.mxu0 0.0
    %385 = vmatprep.subr.mxu0 0.0
    %386 = vmatpush1.msra.mxu0 0.0
    %387 = vmatprep.subr.mxu0 0.0
    %388 = vmatpush1.msra.mxu0 0.0
    %389 = vmatprep.subr.mxu0 0.0
    %390 = vmatpush1.msra.mxu0 0.0
    %391 = vmatprep.subr.mxu0 0.0
    %392 = vmatpush1.msra.mxu0 0.0
    %393 = vmatprep.subr.mxu0 0.0
    %394 = vmatpush1.msra.mxu0 0.0
    %395 = vmatprep.subr.mxu0 0.0
    %396 = vmatpush1.msra.mxu0 0.0
    %397 = vmatprep.mubr.f32.mxu0 0.0
    %398 = vmatmul.mubr.f32.gmra.mrb[0].mxu0 %v331
    %v399 = vpop.f32.mrb[0].mxu0
    %v400 = vadd.f32 0.0, %v399
    %v401 = vpop.f32.mrb[0].mxu0
    %v402 = vadd.f32 0.0, %v401
    %403 = vdwg.mxu0
    %v405 = vrot.slane %v400, 6
    %v407 = vadd.f32 %v158, %v405
    %v409 = vrot.slane %v402, 4
    %v411 = vadd.f32 %v166, %v409
    %v412 = vxor.u32 %v407, 2147483648
    %v413 = vmul.f32 %v412, 1.442695
    %v414 = vpow.pop %v413
    %v415 = vadd.f32 %v414, 1.0
    %v416 = vrcp.pop %v415
    %v417 = vmul.f32 1.0, %v416
    %v418 = vtanh.pop %v407
    %v420 = vrot.slane %v281, 6
    %v422 = vmul.f32 %v417, %v420
    %424 = vrot.lane.b32.xlu0 %v418, 64
    %v425 = vpop.permute.xlu0 %424
    %v427 = vmul.f32 %v417, %v425
    %429 = vrot.lane.b32.xlu0 %v427, 32
    %v430 = vpop.permute.xlu0 %429
    %v432 = vadd.f32 %v422, %v430
    %v433 = vtanh.pop %v432
    %435 = vrot.lane.b32.xlu0 %v433, 64
    %v436 = vpop.permute.xlu0 %435
    %v438 = vmul.f32 %v417, %v436
    %v439 = vxor.u32 %v411, 2147483648
    %v440 = vmul.f32 %v439, 1.442695
    %v441 = vpow.pop %v440
    %v442 = vadd.f32 %v441, 1.0
    %v443 = vrcp.pop %v442
    %v444 = vmul.f32 1.0, %v443
    %v445 = vtanh.pop %v411
    %v447 = vrot.slane %v305, 2
    %v449 = vmul.f32 %v444, %v447
    %451 = vrot.lane.b32.xlu0 %v445, 64
    %v452 = vpop.permute.xlu0 %451
    %v454 = vmul.f32 %v444, %v452
    %456 = vrot.lane.b32.xlu0 %v454, 32
    %v457 = vpop.permute.xlu0 %456
    %v459 = vadd.f32 %v449, %v457
    %v460 = vtanh.pop %v459
    %462 = vrot.lane.b32.xlu0 %v460, 64
    %v463 = vpop.permute.xlu0 %462
    %v465 = vmul.f32 %v444, %v463
    %467 = vrot.lane.b32.xlu0 %v438, 32
    %v468 = vpop.permute.xlu0 %467
    %vm470 = vcmask 257027
    %471 = vst.msk [vmem:[#allocation2 - $0x2] sm:$0x8] %vm470, %v468
    %473 = vrot.lane.b32.xlu0 %v465, 64
    %v474 = vpop.permute.xlu0 %473
    %vm476 = vcmask 521477
    %477 = vst.msk [vmem:[#allocation2 + $0x1] sm:$0x20] %vm476, %v474
    %v478 = vrot.slane %v465, 2
    %479 = vrot.lane.b32.xlu0 %v478, 64
    %v480 = vpop.permute.xlu0 %479
    %v482 = vsel %vm328, %v468, %v480
    %v484 = vrot.slane %v482, 2
    %v485 = vsel %vm184, %v484, 0
    %487 = vmatprep.subr.mxu0 %v169
    %488 = vmatpush1.msra.mxu0 %v168
    %489 = vmatprep.subr.mxu0 %v171
    %490 = vmatpush1.msra.mxu0 %v170
    %491 = vmatprep.subr.mxu0 %v173
    %492 = vmatpush1.msra.mxu0 %v172
    %493 = vmatprep.subr.mxu0 %v175
    %494 = vmatpush1.msra.mxu0 %v174
    %495 = vmatprep.subr.mxu0 %v177
    %496 = vmatpush1.msra.mxu0 %v176
    %497 = vmatprep.subr.mxu0 %v179
    %498 = vmatpush1.msra.mxu0 %v178
    %499 = vmatprep.subr.mxu0 %v181
    %500 = vmatpush1.msra.mxu0 %v180
    %501 = vmatprep.subr.mxu0 %v183
    %502 = vmatpush1.msra.mxu0 %v182
    %503 = vmatprep.subr.mxu0 0.0
    %504 = vmatpush1.msra.mxu0 0.0
    %505 = vmatprep.subr.mxu0 0.0
    %506 = vmatpush1.msra.mxu0 0.0
    %507 = vmatprep.subr.mxu0 0.0
    %508 = vmatpush1.msra.mxu0 0.0
    %509 = vmatprep.subr.mxu0 0.0
    %510 = vmatpush1.msra.mxu0 0.0
    %511 = vmatprep.subr.mxu0 0.0
    %512 = vmatpush1.msra.mxu0 0.0
    %513 = vmatprep.subr.mxu0 0.0
    %514 = vmatpush1.msra.mxu0 0.0
    %515 = vmatprep.subr.mxu0 0.0
    %516 = vmatpush1.msra.mxu0 0.0
    %517 = vmatprep.subr.mxu0 0.0
    %518 = vmatpush1.msra.mxu0 0.0
    %519 = vmatprep.subr.mxu0 0.0
    %520 = vmatpush1.msra.mxu0 0.0
    %521 = vmatprep.subr.mxu0 0.0
    %522 = vmatpush1.msra.mxu0 0.0
    %523 = vmatprep.subr.mxu0 0.0
    %524 = vmatpush1.msra.mxu0 0.0
    %525 = vmatprep.subr.mxu0 0.0
    %526 = vmatpush1.msra.mxu0 0.0
    %527 = vmatprep.subr.mxu0 0.0
    %528 = vmatpush1.msra.mxu0 0.0
    %529 = vmatprep.subr.mxu0 0.0
    %530 = vmatpush1.msra.mxu0 0.0
    %531 = vmatprep.subr.mxu0 0.0
    %532 = vmatpush1.msra.mxu0 0.0
    %533 = vmatprep.subr.mxu0 0.0
    %534 = vmatpush1.msra.mxu0 0.0
    %535 = vmatprep.subr.mxu0 0.0
    %536 = vmatpush1.msra.mxu0 0.0
    %537 = vmatprep.subr.mxu0 0.0
    %538 = vmatpush1.msra.mxu0 0.0
    %539 = vmatprep.subr.mxu0 0.0
    %540 = vmatpush1.msra.mxu0 0.0
    %541 = vmatprep.subr.mxu0 0.0
    %542 = vmatpush1.msra.mxu0 0.0
    %543 = vmatprep.subr.mxu0 0.0
    %544 = vmatpush1.msra.mxu0 0.0
    %545 = vmatprep.subr.mxu0 0.0
    %546 = vmatpush1.msra.mxu0 0.0
    %547 = vmatprep.subr.mxu0 0.0
    %548 = vmatpush1.msra.mxu0 0.0
    %549 = vmatprep.subr.mxu0 0.0
    %550 = vmatpush1.msra.mxu0 0.0
    %551 = vmatprep.mubr.f32.mxu0 0.0
    %552 = vmatmul.mubr.f32.gmra.mrb[0].mxu0 %v485
    %v553 = vpop.f32.mrb[0].mxu0
    %v554 = vadd.f32 0.0, %v553
    %v555 = vpop.f32.mrb[0].mxu0
    %v556 = vadd.f32 0.0, %v555
    %557 = vdwg.mxu0
    %v559 = vrot.slane %v554, 4
    %v561 = vadd.f32 %v158, %v559
    %v563 = vrot.slane %v556, 6
    %v565 = vadd.f32 %v166, %v563
    %v566 = vxor.u32 %v561, 2147483648
    %v567 = vmul.f32 %v566, 1.442695
    %v568 = vpow.pop %v567
    %v569 = vadd.f32 %v568, 1.0
    %v570 = vrcp.pop %v569
    %v571 = vmul.f32 1.0, %v570
    %v572 = vtanh.pop %v561
    %v574 = vrot.slane %v432, 6
    %v576 = vmul.f32 %v571, %v574
    %578 = vrot.lane.b32.xlu0 %v572, 64
    %v579 = vpop.permute.xlu0 %578
    %v581 = vmul.f32 %v571, %v579
    %583 = vrot.lane.b32.xlu0 %v581, 32
    %v584 = vpop.permute.xlu0 %583
    %v586 = vadd.f32 %v576, %v584
    %v587 = vtanh.pop %v586
    %589 = vrot.lane.b32.xlu0 %v587, 64
    %v590 = vpop.permute.xlu0 %589
    %v592 = vmul.f32 %v571, %v590
    %v593 = vxor.u32 %v565, 2147483648
    %v594 = vmul.f32 %v593, 1.442695
    %v595 = vpow.pop %v594
    %v596 = vadd.f32 %v595, 1.0
    %v597 = vrcp.pop %v596
    %v598 = vmul.f32 1.0, %v597
    %v599 = vtanh.pop %v565
    %v601 = vrot.slane %v459, 2
    %v603 = vmul.f32 %v598, %v601
    %605 = vrot.lane.b32.xlu0 %v599, 64
    %v606 = vpop.permute.xlu0 %605
    %v608 = vmul.f32 %v598, %v606
    %610 = vrot.lane.b32.xlu0 %v608, 32
    %v611 = vpop.permute.xlu0 %610
    %v613 = vadd.f32 %v603, %v611
    %v614 = vtanh.pop %v613
    %616 = vrot.lane.b32.xlu0 %v614, 64
    %v617 = vpop.permute.xlu0 %616
    %v619 = vmul.f32 %v598, %v617
    %621 = vrot.lane.b32.xlu0 %v592, 32
    %v622 = vpop.permute.xlu0 %621
    %vm624 = vcmask 259077
    %625 = vst.msk [vmem:[#allocation2 - $0x3] sm:$0x20] %vm624, %v622
    %627 = vrot.lane.b32.xlu0 %v619, 64
    %v628 = vpop.permute.xlu0 %627
    %vm630 = vcmask 519427
    %631 = vst.msk [vmem:[#allocation2 + $0x2] sm:$0x8] %vm630, %v628
    %v632 = vrot.slane %v619, 6
    %633 = vrot.lane.b32.xlu0 %v632, 64
    %v634 = vpop.permute.xlu0 %633
    %v636 = vsel %vm328, %v622, %v634
    %v638 = vrot.slane %v636, 4
    %v639 = vsel %vm184, %v638, 0
    %641 = vmatprep.subr.mxu0 %v169
    %642 = vmatpush1.msra.mxu0 %v168
    %643 = vmatprep.subr.mxu0 %v171
    %644 = vmatpush1.msra.mxu0 %v170
    %645 = vmatprep.subr.mxu0 %v173
    %646 = vmatpush1.msra.mxu0 %v172
    %647 = vmatprep.subr.mxu0 %v175
    %648 = vmatpush1.msra.mxu0 %v174
    %649 = vmatprep.subr.mxu0 %v177
    %650 = vmatpush1.msra.mxu0 %v176
    %651 = vmatprep.subr.mxu0 %v179
    %652 = vmatpush1.msra.mxu0 %v178
    %653 = vmatprep.subr.mxu0 %v181
    %654 = vmatpush1.msra.mxu0 %v180
    %655 = vmatprep.subr.mxu0 %v183
    %656 = vmatpush1.msra.mxu0 %v182
    %657 = vmatprep.subr.mxu0 0.0
    %658 = vmatpush1.msra.mxu0 0.0
    %659 = vmatprep.subr.mxu0 0.0
    %660 = vmatpush1.msra.mxu0 0.0
    %661 = vmatprep.subr.mxu0 0.0
    %662 = vmatpush1.msra.mxu0 0.0
    %663 = vmatprep.subr.mxu0 0.0
    %664 = vmatpush1.msra.mxu0 0.0
    %665 = vmatprep.subr.mxu0 0.0
    %666 = vmatpush1.msra.mxu0 0.0
    %667 = vmatprep.subr.mxu0 0.0
    %668 = vmatpush1.msra.mxu0 0.0
    %669 = vmatprep.subr.mxu0 0.0
    %670 = vmatpush1.msra.mxu0 0.0
    %671 = vmatprep.subr.mxu0 0.0
    %672 = vmatpush1.msra.mxu0 0.0
    %673 = vmatprep.subr.mxu0 0.0
    %674 = vmatpush1.msra.mxu0 0.0
    %675 = vmatprep.subr.mxu0 0.0
    %676 = vmatpush1.msra.mxu0 0.0
    %677 = vmatprep.subr.mxu0 0.0
    %678 = vmatpush1.msra.mxu0 0.0
    %679 = vmatprep.subr.mxu0 0.0
    %680 = vmatpush1.msra.mxu0 0.0
    %681 = vmatprep.subr.mxu0 0.0
    %682 = vmatpush1.msra.mxu0 0.0
    %683 = vmatprep.subr.mxu0 0.0
    %684 = vmatpush1.msra.mxu0 0.0
    %685 = vmatprep.subr.mxu0 0.0
    %686 = vmatpush1.msra.mxu0 0.0
    %687 = vmatprep.subr.mxu0 0.0
    %688 = vmatpush1.msra.mxu0 0.0
    %689 = vmatprep.subr.mxu0 0.0
    %690 = vmatpush1.msra.mxu0 0.0
    %691 = vmatprep.subr.mxu0 0.0
    %692 = vmatpush1.msra.mxu0 0.0
    %693 = vmatprep.subr.mxu0 0.0
    %694 = vmatpush1.msra.mxu0 0.0
    %695 = vmatprep.subr.mxu0 0.0
    %696 = vmatpush1.msra.mxu0 0.0
    %697 = vmatprep.subr.mxu0 0.0
    %698 = vmatpush1.msra.mxu0 0.0
    %699 = vmatprep.subr.mxu0 0.0
    %700 = vmatpush1.msra.mxu0 0.0
    %701 = vmatprep.subr.mxu0 0.0
    %702 = vmatpush1.msra.mxu0 0.0
    %703 = vmatprep.subr.mxu0 0.0
    %704 = vmatpush1.msra.mxu0 0.0
    %705 = vmatprep.mubr.f32.mxu0 0.0
    %706 = vmatmul.mubr.f32.gmra.mrb[0].mxu0 %v639
    %v707 = vpop.f32.mrb[0].mxu0
    %v708 = vadd.f32 0.0, %v707
    %v709 = vpop.f32.mrb[0].mxu0
    %v710 = vadd.f32 0.0, %v709
    %711 = vdwg.mxu0
    %v713 = vrot.slane %v708, 2
    %v715 = vadd.f32 %v158, %v713
    %v716 = vadd.f32 %v166, %v710
    %v717 = vxor.u32 %v715, 2147483648
    %v718 = vmul.f32 %v717, 1.442695
    %v719 = vpow.pop %v718
    %v720 = vadd.f32 %v719, 1.0
    %v721 = vrcp.pop %v720
    %v722 = vmul.f32 1.0, %v721
    %v723 = vtanh.pop %v715
    %v725 = vrot.slane %v586, 6
    %v727 = vmul.f32 %v722, %v725
    %729 = vrot.lane.b32.xlu0 %v723, 64
    %v730 = vpop.permute.xlu0 %729
    %v732 = vmul.f32 %v722, %v730
    %734 = vrot.lane.b32.xlu0 %v732, 32
    %v735 = vpop.permute.xlu0 %734
    %v737 = vadd.f32 %v727, %v735
    %v738 = vtanh.pop %v737
    %740 = vrot.lane.b32.xlu0 %v738, 64
    %v741 = vpop.permute.xlu0 %740
    %v743 = vmul.f32 %v722, %v741
    %v744 = vxor.u32 %v716, 2147483648
    %v745 = vmul.f32 %v744, 1.442695
    %v746 = vpow.pop %v745
    %v747 = vadd.f32 %v746, 1.0
    %v748 = vrcp.pop %v747
    %v749 = vmul.f32 1.0, %v748
    %v750 = vtanh.pop %v716
    %v752 = vrot.slane %v613, 2
    %v754 = vmul.f32 %v749, %v752
    %756 = vrot.lane.b32.xlu0 %v750, 64
    %v757 = vpop.permute.xlu0 %756
    %v759 = vmul.f32 %v749, %v757
    %761 = vrot.lane.b32.xlu0 %v759, 32
    %v762 = vpop.permute.xlu0 %761
    %v764 = vadd.f32 %v754, %v762
    %v765 = vtanh.pop %v764
    %767 = vrot.lane.b32.xlu0 %v765, 64
    %v768 = vpop.permute.xlu0 %767
    %v770 = vmul.f32 %v749, %v768
    %772 = vrot.lane.b32.xlu0 %v743, 32
    %v773 = vpop.permute.xlu0 %772
    %vm775 = vcmask 261127
    %776 = vst.msk [vmem:[#allocation2 - $0x4] sm:$0x80] %vm775, %v773
    %778 = vrot.lane.b32.xlu0 %v770, 64
    %v779 = vpop.permute.xlu0 %778
    %vm781 = vcmask 517377
    %782 = vst.msk [vmem:[#allocation2 + $0x3] sm:$0x2] %vm781, %v779
    %v783 = vrot.slane %v770, 2
    %784 = vrot.lane.b32.xlu0 %v783, 64
    %v785 = vpop.permute.xlu0 %784
    %v787 = vsel %vm328, %v773, %v785
    %v789 = vrot.slane %v787, 6
    %v790 = vsel %vm184, %v789, 0
    %792 = vmatprep.subr.mxu0 %v169
    %793 = vmatpush1.msra.mxu0 %v168
    %794 = vmatprep.subr.mxu0 %v171
    %795 = vmatpush1.msra.mxu0 %v170
    %796 = vmatprep.subr.mxu0 %v173
    %797 = vmatpush1.msra.mxu0 %v172
    %798 = vmatprep.subr.mxu0 %v175
    %799 = vmatpush1.msra.mxu0 %v174
    %800 = vmatprep.subr.mxu0 %v177
    %801 = vmatpush1.msra.mxu0 %v176
    %802 = vmatprep.subr.mxu0 %v179
    %803 = vmatpush1.msra.mxu0 %v178
    %804 = vmatprep.subr.mxu0 %v181
    %805 = vmatpush1.msra.mxu0 %v180
    %806 = vmatprep.subr.mxu0 %v183
    %807 = vmatpush1.msra.mxu0 %v182
    %808 = vmatprep.subr.mxu0 0.0
    %809 = vmatpush1.msra.mxu0 0.0
    %810 = vmatprep.subr.mxu0 0.0
    %811 = vmatpush1.msra.mxu0 0.0
    %812 = vmatprep.subr.mxu0 0.0
    %813 = vmatpush1.msra.mxu0 0.0
    %814 = vmatprep.subr.mxu0 0.0
    %815 = vmatpush1.msra.mxu0 0.0
    %816 = vmatprep.subr.mxu0 0.0
    %817 = vmatpush1.msra.mxu0 0.0
    %818 = vmatprep.subr.mxu0 0.0
    %819 = vmatpush1.msra.mxu0 0.0
    %820 = vmatprep.subr.mxu0 0.0
    %821 = vmatpush1.msra.mxu0 0.0
    %822 = vmatprep.subr.mxu0 0.0
    %823 = vmatpush1.msra.mxu0 0.0
    %824 = vmatprep.subr.mxu0 0.0
    %825 = vmatpush1.msra.mxu0 0.0
    %826 = vmatprep.subr.mxu0 0.0
    %827 = vmatpush1.msra.mxu0 0.0
    %828 = vmatprep.subr.mxu0 0.0
    %829 = vmatpush1.msra.mxu0 0.0
    %830 = vmatprep.subr.mxu0 0.0
    %831 = vmatpush1.msra.mxu0 0.0
    %832 = vmatprep.subr.mxu0 0.0
    %833 = vmatpush1.msra.mxu0 0.0
    %834 = vmatprep.subr.mxu0 0.0
    %835 = vmatpush1.msra.mxu0 0.0
    %836 = vmatprep.subr.mxu0 0.0
    %837 = vmatpush1.msra.mxu0 0.0
    %838 = vmatprep.subr.mxu0 0.0
    %839 = vmatpush1.msra.mxu0 0.0
    %840 = vmatprep.subr.mxu0 0.0
    %841 = vmatpush1.msra.mxu0 0.0
    %842 = vmatprep.subr.mxu0 0.0
    %843 = vmatpush1.msra.mxu0 0.0
    %844 = vmatprep.subr.mxu0 0.0
    %845 = vmatpush1.msra.mxu0 0.0
    %846 = vmatprep.subr.mxu0 0.0
    %847 = vmatpush1.msra.mxu0 0.0
    %848 = vmatprep.subr.mxu0 0.0
    %849 = vmatpush1.msra.mxu0 0.0
    %850 = vmatprep.subr.mxu0 0.0
    %851 = vmatpush1.msra.mxu0 0.0
    %852 = vmatprep.subr.mxu0 0.0
    %853 = vmatpush1.msra.mxu0 0.0
    %854 = vmatprep.subr.mxu0 0.0
    %855 = vmatpush1.msra.mxu0 0.0
    %856 = vmatprep.mubr.f32.mxu0 0.0
    %857 = vmatmul.mubr.f32.gmra.mrb[0].mxu0 %v790
    %v858 = vpop.f32.mrb[0].mxu0
    %v859 = vadd.f32 0.0, %v858
    %v860 = vpop.f32.mrb[0].mxu0
    %v861 = vadd.f32 0.0, %v860
    %862 = vdwg.mxu0
    %v863 = vadd.f32 %v164, %v859
    %v865 = vrot.slane %v861, 2
    %v867 = vadd.f32 %v160, %v865
    %v868 = vxor.u32 %v863, 2147483648
    %v869 = vmul.f32 %v868, 1.442695
    %v870 = vpow.pop %v869
    %v871 = vadd.f32 %v870, 1.0
    %v872 = vrcp.pop %v871
    %v873 = vmul.f32 1.0, %v872
    %v874 = vtanh.pop %v863
    %v876 = vrot.slane %v737, 6
    %v878 = vmul.f32 %v873, %v876
    %880 = vrot.lane.b32.xlu0 %v874, 64
    %v881 = vpop.permute.xlu0 %880
    %v883 = vmul.f32 %v873, %v881
    %885 = vrot.lane.b32.xlu0 %v883, 32
    %v886 = vpop.permute.xlu0 %885
    %v888 = vadd.f32 %v878, %v886
    %v889 = vtanh.pop %v888
    %891 = vrot.lane.b32.xlu0 %v889, 64
    %v892 = vpop.permute.xlu0 %891
    %v894 = vmul.f32 %v873, %v892
    %v895 = vxor.u32 %v867, 2147483648
    %v896 = vmul.f32 %v895, 1.442695
    %v897 = vpow.pop %v896
    %v898 = vadd.f32 %v897, 1.0
    %v899 = vrcp.pop %v898
    %v900 = vmul.f32 1.0, %v899
    %v901 = vtanh.pop %v867
    %v903 = vrot.slane %v764, 2
    %v905 = vmul.f32 %v900, %v903
    %907 = vrot.lane.b32.xlu0 %v901, 64
    %v908 = vpop.permute.xlu0 %907
    %v910 = vmul.f32 %v900, %v908
    %912 = vrot.lane.b32.xlu0 %v910, 32
    %v913 = vpop.permute.xlu0 %912
    %v915 = vadd.f32 %v905, %v913
    %v916 = vtanh.pop %v915
    %918 = vrot.lane.b32.xlu0 %v916, 64
    %v919 = vpop.permute.xlu0 %918
    %v921 = vmul.f32 %v900, %v919
    %923 = vrot.lane.b32.xlu0 %v894, 32
    %v924 = vpop.permute.xlu0 %923
    %926 = vst.msk [vmem:[#allocation2 + $0x3] sm:$0x2] %vm316, %v924
    %928 = vrot.lane.b32.xlu0 %v921, 64
    %v929 = vpop.permute.xlu0 %928
    %931 = vst.msk [vmem:[#allocation2 - $0x4] sm:$0x80] %vm322, %v929
    %v932 = vrot.slane %v921, 6
    %933 = vrot.lane.b32.xlu0 %v932, 64
    %v934 = vpop.permute.xlu0 %933
    %v936 = vsel %vm328, %v924, %v934
    %v938 = vsel %vm184, %v936, 0
    %940 = vmatprep.subr.mxu0 %v169
    %941 = vmatpush1.msra.mxu0 %v168
    %942 = vmatprep.subr.mxu0 %v171
    %943 = vmatpush1.msra.mxu0 %v170
    %944 = vmatprep.subr.mxu0 %v173
    %945 = vmatpush1.msra.mxu0 %v172
    %946 = vmatprep.subr.mxu0 %v175
    %947 = vmatpush1.msra.mxu0 %v174
    %948 = vmatprep.subr.mxu0 %v177
    %949 = vmatpush1.msra.mxu0 %v176
    %950 = vmatprep.subr.mxu0 %v179
    %951 = vmatpush1.msra.mxu0 %v178
    %952 = vmatprep.subr.mxu0 %v181
    %953 = vmatpush1.msra.mxu0 %v180
    %954 = vmatprep.subr.mxu0 %v183
    %955 = vmatpush1.msra.mxu0 %v182
    %956 = vmatprep.subr.mxu0 0.0
    %957 = vmatpush1.msra.mxu0 0.0
    %958 = vmatprep.subr.mxu0 0.0
    %959 = vmatpush1.msra.mxu0 0.0
    %960 = vmatprep.subr.mxu0 0.0
    %961 = vmatpush1.msra.mxu0 0.0
    %962 = vmatprep.subr.mxu0 0.0
    %963 = vmatpush1.msra.mxu0 0.0
    %964 = vmatprep.subr.mxu0 0.0
    %965 = vmatpush1.msra.mxu0 0.0
    %966 = vmatprep.subr.mxu0 0.0
    %967 = vmatpush1.msra.mxu0 0.0
    %968 = vmatprep.subr.mxu0 0.0
    %969 = vmatpush1.msra.mxu0 0.0
    %970 = vmatprep.subr.mxu0 0.0
    %971 = vmatpush1.msra.mxu0 0.0
    %972 = vmatprep.subr.mxu0 0.0
    %973 = vmatpush1.msra.mxu0 0.0
    %974 = vmatprep.subr.mxu0 0.0
    %975 = vmatpush1.msra.mxu0 0.0
    %976 = vmatprep.subr.mxu0 0.0
    %977 = vmatpush1.msra.mxu0 0.0
    %978 = vmatprep.subr.mxu0 0.0
    %979 = vmatpush1.msra.mxu0 0.0
    %980 = vmatprep.subr.mxu0 0.0
    %981 = vmatpush1.msra.mxu0 0.0
    %982 = vmatprep.subr.mxu0 0.0
    %983 = vmatpush1.msra.mxu0 0.0
    %984 = vmatprep.subr.mxu0 0.0
    %985 = vmatpush1.msra.mxu0 0.0
    %986 = vmatprep.subr.mxu0 0.0
    %987 = vmatpush1.msra.mxu0 0.0
    %988 = vmatprep.subr.mxu0 0.0
    %989 = vmatpush1.msra.mxu0 0.0
    %990 = vmatprep.subr.mxu0 0.0
    %991 = vmatpush1.msra.mxu0 0.0
    %992 = vmatprep.subr.mxu0 0.0
    %993 = vmatpush1.msra.mxu0 0.0
    %994 = vmatprep.subr.mxu0 0.0
    %995 = vmatpush1.msra.mxu0 0.0
    %996 = vmatprep.subr.mxu0 0.0
    %997 = vmatpush1.msra.mxu0 0.0
    %998 = vmatprep.subr.mxu0 0.0
    %999 = vmatpush1.msra.mxu0 0.0
    %1000 = vmatprep.subr.mxu0 0.0
    %1001 = vmatpush1.msra.mxu0 0.0
    %1002 = vmatprep.subr.mxu0 0.0
    %1003 = vmatpush1.msra.mxu0 0.0
    %1004 = vmatprep.mubr.f32.mxu0 0.0
    %1005 = vmatmul.mubr.f32.gmra.mrb[0].mxu0 %v938
    %v1006 = vpop.f32.mrb[0].mxu0
    %v1007 = vadd.f32 0.0, %v1006
    %v1008 = vpop.f32.mrb[0].mxu0
    %v1009 = vadd.f32 0.0, %v1008
    %1010 = vdwg.mxu0
    %v1012 = vrot.slane %v1007, 6
    %v1014 = vadd.f32 %v164, %v1012
    %v1016 = vrot.slane %v1009, 4
    %v1018 = vadd.f32 %v160, %v1016
    %v1019 = vxor.u32 %v1014, 2147483648
    %v1020 = vmul.f32 %v1019, 1.442695
    %v1021 = vpow.pop %v1020
    %v1022 = vadd.f32 %v1021, 1.0
    %v1023 = vrcp.pop %v1022
    %v1024 = vmul.f32 1.0, %v1023
    %v1025 = vtanh.pop %v1014
    %v1027 = vrot.slane %v888, 6
    %v1029 = vmul.f32 %v1024, %v1027
    %1031 = vrot.lane.b32.xlu0 %v1025, 64
    %v1032 = vpop.permute.xlu0 %1031
    %v1034 = vmul.f32 %v1024, %v1032
    %1036 = vrot.lane.b32.xlu0 %v1034, 32
    %v1037 = vpop.permute.xlu0 %1036
    %v1039 = vadd.f32 %v1029, %v1037
    %v1040 = vtanh.pop %v1039
    %1042 = vrot.lane.b32.xlu0 %v1040, 64
    %v1043 = vpop.permute.xlu0 %1042
    %v1045 = vmul.f32 %v1024, %v1043
    %v1046 = vxor.u32 %v1018, 2147483648
    %v1047 = vmul.f32 %v1046, 1.442695
    %v1048 = vpow.pop %v1047
    %v1049 = vadd.f32 %v1048, 1.0
    %v1050 = vrcp.pop %v1049
    %v1051 = vmul.f32 1.0, %v1050
    %v1052 = vtanh.pop %v1018
    %v1054 = vrot.slane %v915, 2
    %v1056 = vmul.f32 %v1051, %v1054
    %1058 = vrot.lane.b32.xlu0 %v1052, 64
    %v1059 = vpop.permute.xlu0 %1058
    %v1061 = vmul.f32 %v1051, %v1059
    %1063 = vrot.lane.b32.xlu0 %v1061, 32
    %v1064 = vpop.permute.xlu0 %1063
    %v1066 = vadd.f32 %v1056, %v1064
    %v1067 = vtanh.pop %v1066
    %1069 = vrot.lane.b32.xlu0 %v1067, 64
    %v1070 = vpop.permute.xlu0 %1069
    %v1072 = vmul.f32 %v1051, %v1070
    %1074 = vrot.lane.b32.xlu0 %v1045, 32
    %v1075 = vpop.permute.xlu0 %1074
    %1077 = vst.msk [vmem:[#allocation2 + $0x2] sm:$0x8] %vm470, %v1075
    %1079 = vrot.lane.b32.xlu0 %v1072, 64
    %v1080 = vpop.permute.xlu0 %1079
    %1082 = vst.msk [vmem:[#allocation2 - $0x3] sm:$0x20] %vm476, %v1080
    %v1083 = vrot.slane %v1072, 2
    %1084 = vrot.lane.b32.xlu0 %v1083, 64
    %v1085 = vpop.permute.xlu0 %1084
    %v1087 = vsel %vm328, %v1075, %v1085
    %v1089 = vrot.slane %v1087, 2
    %v1090 = vsel %vm184, %v1089, 0
    %1092 = vmatprep.subr.mxu0 %v169
    %1093 = vmatpush1.msra.mxu0 %v168
    %1094 = vmatprep.subr.mxu0 %v171
    %1095 = vmatpush1.msra.mxu0 %v170
    %1096 = vmatprep.subr.mxu0 %v173
    %1097 = vmatpush1.msra.mxu0 %v172
    %1098 = vmatprep.subr.mxu0 %v175
    %1099 = vmatpush1.msra.mxu0 %v174
    %1100 = vmatprep.subr.mxu0 %v177
    %1101 = vmatpush1.msra.mxu0 %v176
    %1102 = vmatprep.subr.mxu0 %v179
    %1103 = vmatpush1.msra.mxu0 %v178
    %1104 = vmatprep.subr.mxu0 %v181
    %1105 = vmatpush1.msra.mxu0 %v180
    %1106 = vmatprep.subr.mxu0 %v183
    %1107 = vmatpush1.msra.mxu0 %v182
    %1108 = vmatprep.subr.mxu0 0.0
    %1109 = vmatpush1.msra.mxu0 0.0
    %1110 = vmatprep.subr.mxu0 0.0
    %1111 = vmatpush1.msra.mxu0 0.0
    %1112 = vmatprep.subr.mxu0 0.0
    %1113 = vmatpush1.msra.mxu0 0.0
    %1114 = vmatprep.subr.mxu0 0.0
    %1115 = vmatpush1.msra.mxu0 0.0
    %1116 = vmatprep.subr.mxu0 0.0
    %1117 = vmatpush1.msra.mxu0 0.0
    %1118 = vmatprep.subr.mxu0 0.0
    %1119 = vmatpush1.msra.mxu0 0.0
    %1120 = vmatprep.subr.mxu0 0.0
    %1121 = vmatpush1.msra.mxu0 0.0
    %1122 = vmatprep.subr.mxu0 0.0
    %1123 = vmatpush1.msra.mxu0 0.0
    %1124 = vmatprep.subr.mxu0 0.0
    %1125 = vmatpush1.msra.mxu0 0.0
    %1126 = vmatprep.subr.mxu0 0.0
    %1127 = vmatpush1.msra.mxu0 0.0
    %1128 = vmatprep.subr.mxu0 0.0
    %1129 = vmatpush1.msra.mxu0 0.0
    %1130 = vmatprep.subr.mxu0 0.0
    %1131 = vmatpush1.msra.mxu0 0.0
    %1132 = vmatprep.subr.mxu0 0.0
    %1133 = vmatpush1.msra.mxu0 0.0
    %1134 = vmatprep.subr.mxu0 0.0
    %1135 = vmatpush1.msra.mxu0 0.0
    %1136 = vmatprep.subr.mxu0 0.0
    %1137 = vmatpush1.msra.mxu0 0.0
    %1138 = vmatprep.subr.mxu0 0.0
    %1139 = vmatpush1.msra.mxu0 0.0
    %1140 = vmatprep.subr.mxu0 0.0
    %1141 = vmatpush1.msra.mxu0 0.0
    %1142 = vmatprep.subr.mxu0 0.0
    %1143 = vmatpush1.msra.mxu0 0.0
    %1144 = vmatprep.subr.mxu0 0.0
    %1145 = vmatpush1.msra.mxu0 0.0
    %1146 = vmatprep.subr.mxu0 0.0
    %1147 = vmatpush1.msra.mxu0 0.0
    %1148 = vmatprep.subr.mxu0 0.0
    %1149 = vmatpush1.msra.mxu0 0.0
    %1150 = vmatprep.subr.mxu0 0.0
    %1151 = vmatpush1.msra.mxu0 0.0
    %1152 = vmatprep.subr.mxu0 0.0
    %1153 = vmatpush1.msra.mxu0 0.0
    %1154 = vmatprep.subr.mxu0 0.0
    %1155 = vmatpush1.msra.mxu0 0.0
    %1156 = vmatprep.mubr.f32.mxu0 0.0
    %1157 = vmatmul.mubr.f32.gmra.mrb[0].mxu0 %v1090
    %v1158 = vpop.f32.mrb[0].mxu0
    %v1159 = vadd.f32 0.0, %v1158
    %v1160 = vpop.f32.mrb[0].mxu0
    %v1161 = vadd.f32 0.0, %v1160
    %1162 = vdwg.mxu0
    %v1164 = vrot.slane %v1159, 4
    %v1166 = vadd.f32 %v164, %v1164
    %v1168 = vrot.slane %v1161, 6
    %v1170 = vadd.f32 %v160, %v1168
    %v1171 = vxor.u32 %v1166, 2147483648
    %v1172 = vmul.f32 %v1171, 1.442695
    %v1173 = vpow.pop %v1172
    %v1174 = vadd.f32 %v1173, 1.0
    %v1175 = vrcp.pop %v1174
    %v1176 = vmul.f32 1.0, %v1175
    %v1177 = vtanh.pop %v1166
    %v1179 = vrot.slane %v1039, 6
    %v1181 = vmul.f32 %v1176, %v1179
    %1183 = vrot.lane.b32.xlu0 %v1177, 64
    %v1184 = vpop.permute.xlu0 %1183
    %v1186 = vmul.f32 %v1176, %v1184
    %1188 = vrot.lane.b32.xlu0 %v1186, 32
    %v1189 = vpop.permute.xlu0 %1188
    %v1191 = vadd.f32 %v1181, %v1189
    %v1192 = vtanh.pop %v1191
    %1194 = vrot.lane.b32.xlu0 %v1192, 64
    %v1195 = vpop.permute.xlu0 %1194
    %v1197 = vmul.f32 %v1176, %v1195
    %v1198 = vxor.u32 %v1170, 2147483648
    %v1199 = vmul.f32 %v1198, 1.442695
    %v1200 = vpow.pop %v1199
    %v1201 = vadd.f32 %v1200, 1.0
    %v1202 = vrcp.pop %v1201
    %v1203 = vmul.f32 1.0, %v1202
    %v1204 = vtanh.pop %v1170
    %v1206 = vrot.slane %v1066, 2
    %v1208 = vmul.f32 %v1203, %v1206
    %1210 = vrot.lane.b32.xlu0 %v1204, 64
    %v1211 = vpop.permute.xlu0 %1210
    %v1213 = vmul.f32 %v1203, %v1211
    %1215 = vrot.lane.b32.xlu0 %v1213, 32
    %v1216 = vpop.permute.xlu0 %1215
    %v1218 = vadd.f32 %v1208, %v1216
    %v1219 = vtanh.pop %v1218
    %1221 = vrot.lane.b32.xlu0 %v1219, 64
    %v1222 = vpop.permute.xlu0 %1221
    %v1224 = vmul.f32 %v1203, %v1222
    %1226 = vrot.lane.b32.xlu0 %v1197, 32
    %v1227 = vpop.permute.xlu0 %1226
    %1229 = vst.msk [vmem:[#allocation2 + $0x1] sm:$0x20] %vm624, %v1227
    %1231 = vrot.lane.b32.xlu0 %v1224, 64
    %v1232 = vpop.permute.xlu0 %1231
    %1234 = vst.msk [vmem:[#allocation2 - $0x2] sm:$0x8] %vm630, %v1232
    %v1235 = vrot.slane %v1224, 6
    %1236 = vrot.lane.b32.xlu0 %v1235, 64
    %v1237 = vpop.permute.xlu0 %1236
    %v1239 = vsel %vm328, %v1227, %v1237
    %v1241 = vrot.slane %v1239, 4
    %v1242 = vsel %vm184, %v1241, 0
    %1244 = vmatprep.subr.mxu0 %v169
    %1245 = vmatpush1.msra.mxu0 %v168
    %1246 = vmatprep.subr.mxu0 %v171
    %1247 = vmatpush1.msra.mxu0 %v170
    %1248 = vmatprep.subr.mxu0 %v173
    %1249 = vmatpush1.msra.mxu0 %v172
    %1250 = vmatprep.subr.mxu0 %v175
    %1251 = vmatpush1.msra.mxu0 %v174
    %1252 = vmatprep.subr.mxu0 %v177
    %1253 = vmatpush1.msra.mxu0 %v176
    %1254 = vmatprep.subr.mxu0 %v179
    %1255 = vmatpush1.msra.mxu0 %v178
    %1256 = vmatprep.subr.mxu0 %v181
    %1257 = vmatpush1.msra.mxu0 %v180
    %1258 = vmatprep.subr.mxu0 %v183
    %1259 = vmatpush1.msra.mxu0 %v182
    %1260 = vmatprep.subr.mxu0 0.0
    %1261 = vmatpush1.msra.mxu0 0.0
    %1262 = vmatprep.subr.mxu0 0.0
    %1263 = vmatpush1.msra.mxu0 0.0
    %1264 = vmatprep.subr.mxu0 0.0
    %1265 = vmatpush1.msra.mxu0 0.0
    %1266 = vmatprep.subr.mxu0 0.0
    %1267 = vmatpush1.msra.mxu0 0.0
    %1268 = vmatprep.subr.mxu0 0.0
    %1269 = vmatpush1.msra.mxu0 0.0
    %1270 = vmatprep.subr.mxu0 0.0
    %1271 = vmatpush1.msra.mxu0 0.0
    %1272 = vmatprep.subr.mxu0 0.0
    %1273 = vmatpush1.msra.mxu0 0.0
    %1274 = vmatprep.subr.mxu0 0.0
    %1275 = vmatpush1.msra.mxu0 0.0
    %1276 = vmatprep.subr.mxu0 0.0
    %1277 = vmatpush1.msra.mxu0 0.0
    %1278 = vmatprep.subr.mxu0 0.0
    %1279 = vmatpush1.msra.mxu0 0.0
    %1280 = vmatprep.subr.mxu0 0.0
    %1281 = vmatpush1.msra.mxu0 0.0
    %1282 = vmatprep.subr.mxu0 0.0
    %1283 = vmatpush1.msra.mxu0 0.0
    %1284 = vmatprep.subr.mxu0 0.0
    %1285 = vmatpush1.msra.mxu0 0.0
    %1286 = vmatprep.subr.mxu0 0.0
    %1287 = vmatpush1.msra.mxu0 0.0
    %1288 = vmatprep.subr.mxu0 0.0
    %1289 = vmatpush1.msra.mxu0 0.0
    %1290 = vmatprep.subr.mxu0 0.0
    %1291 = vmatpush1.msra.mxu0 0.0
    %1292 = vmatprep.subr.mxu0 0.0
    %1293 = vmatpush1.msra.mxu0 0.0
    %1294 = vmatprep.subr.mxu0 0.0
    %1295 = vmatpush1.msra.mxu0 0.0
    %1296 = vmatprep.subr.mxu0 0.0
    %1297 = vmatpush1.msra.mxu0 0.0
    %1298 = vmatprep.subr.mxu0 0.0
    %1299 = vmatpush1.msra.mxu0 0.0
    %1300 = vmatprep.subr.mxu0 0.0
    %1301 = vmatpush1.msra.mxu0 0.0
    %1302 = vmatprep.subr.mxu0 0.0
    %1303 = vmatpush1.msra.mxu0 0.0
    %1304 = vmatprep.subr.mxu0 0.0
    %1305 = vmatpush1.msra.mxu0 0.0
    %1306 = vmatprep.subr.mxu0 0.0
    %1307 = vmatpush1.msra.mxu0 0.0
    %1308 = vmatprep.mubr.f32.mxu0 0.0
    %1309 = vmatmul.mubr.f32.gmra.mrb[0].mxu0 %v1242
    %v1310 = vpop.f32.mrb[0].mxu0
    %v1311 = vadd.f32 0.0, %v1310
    %v1312 = vpop.f32.mrb[0].mxu0
    %v1313 = vadd.f32 0.0, %v1312
    %1314 = vdwg.mxu0
    %v1316 = vrot.slane %v1311, 2
    %v1318 = vadd.f32 %v164, %v1316
    %v1319 = vadd.f32 %v160, %v1313
    %v1320 = vxor.u32 %v1318, 2147483648
    %v1321 = vmul.f32 %v1320, 1.442695
    %v1322 = vpow.pop %v1321
    %v1323 = vadd.f32 %v1322, 1.0
    %v1324 = vrcp.pop %v1323
    %v1325 = vmul.f32 1.0, %v1324
    %v1326 = vtanh.pop %v1318
    %v1328 = vrot.slane %v1191, 6
    %v1330 = vmul.f32 %v1325, %v1328
    %1332 = vrot.lane.b32.xlu0 %v1326, 64
    %v1333 = vpop.permute.xlu0 %1332
    %v1335 = vmul.f32 %v1325, %v1333
    %1337 = vrot.lane.b32.xlu0 %v1335, 32
    %v1338 = vpop.permute.xlu0 %1337
    %v1340 = vadd.f32 %v1330, %v1338
    %v1341 = vtanh.pop %v1340
    %1343 = vrot.lane.b32.xlu0 %v1341, 64
    %v1344 = vpop.permute.xlu0 %1343
    %v1346 = vmul.f32 %v1325, %v1344
    %v1347 = vxor.u32 %v1319, 2147483648
    %v1348 = vmul.f32 %v1347, 1.442695
    %v1349 = vpow.pop %v1348
    %v1350 = vadd.f32 %v1349, 1.0
    %v1351 = vrcp.pop %v1350
    %v1352 = vmul.f32 1.0, %v1351
    %v1353 = vtanh.pop %v1319
    %v1355 = vrot.slane %v1218, 2
    %v1357 = vmul.f32 %v1352, %v1355
    %1359 = vrot.lane.b32.xlu0 %v1353, 64
    %v1360 = vpop.permute.xlu0 %1359
    %v1362 = vmul.f32 %v1352, %v1360
    %1364 = vrot.lane.b32.xlu0 %v1362, 32
    %v1365 = vpop.permute.xlu0 %1364
    %v1367 = vadd.f32 %v1357, %v1365
    %v1368 = vtanh.pop %v1367
    %1370 = vrot.lane.b32.xlu0 %v1368, 64
    %v1371 = vpop.permute.xlu0 %1370
    %v1373 = vmul.f32 %v1352, %v1371
    %1375 = vrot.lane.b32.xlu0 %v1346, 32
    %v1376 = vpop.permute.xlu0 %1375
    %1378 = vst.msk [vmem:[#allocation2] sm:$0x80] %vm775, %v1376
    %1380 = vrot.lane.b32.xlu0 %v1373, 64
    %v1381 = vpop.permute.xlu0 %1380
    %1383 = vst.msk [vmem:[#allocation2 - $0x1] sm:$0x2] %vm781, %v1381
    %v1384 = vld [vmem:[#allocation2] sm:$0xff]
    %v1385 = vld [vmem:[%s4] sm:$0x1]
    %v1387 = vlaneseq
    %v1388 = vshrl.u32 %v1387, 7
    %v1389 = vsub.s32 0, %v1388
    %v1390 = vrot.slane %v1385, %v1389
    %v1392 = vmul.f32 %v1384, %v1390
    %v1393 = vsel %vm184, %v1392, 0.0
    %1394 = vadd.xlane.f32.xlu0 %v1393
    %v1395 = vpop.xlane.xlu0 %1394
    %v1396 = vld [vmem:[#allocation3] sm:$0x1]
    %v1398 = vlaneseq
    %v1399 = vshrl.u32 %v1398, 7
    %v1400 = vsub.s32 0, %v1399
    %v1401 = vrot.slane %v1396, %v1400
    %v1403 = vadd.f32 %v1395, %v1401
    %vm1404 = vcmask 7168
    %1405 = vst.msk [vmem:[%s6] sm:$0xff] %vm1404, %v1403
    // Predicated region
    $region38: #{tpu_custom_call.1} parent=1 // pred_check
      _
    $region39: #{tpu_custom_call.1} parent=1 // pred_check_branch
      %1407 = sbr.rel (0) target = $region41
    $region40: #{tpu_custom_call.1} parent=1 // pred_region
      _
    $region41: #{tpu_custom_call.1} parent=1 // pred_fallthru
      _
    // Predicated region
    $region42: #{tpu_custom_call.1} parent=1 // pred_check
      _
    $region43: #{tpu_custom_call.1} parent=1 // pred_check_branch
      %1409 = sbr.rel (0) target = $region45
    $region44: #{tpu_custom_call.1} parent=1 // pred_region
      _
    $region45: #{tpu_custom_call.1} parent=1 // pred_fallthru
      _
    %1410 = vsyncpa [#allocation5], 1
    %1411 = vsyncpa [#allocation7], 1

</llo_original>
